<compile_context>
chip_gen: v7x
topology: tpu7x:2x2x1
jax: 0.10.0
libtpu: 0.0.40
codegen_flags: <defaults>
</compile_context>

<pallas_src>
import functools

import jax
import jax.numpy as jnp
from jax.experimental import pallas as pl
from jax.experimental.pallas import tpu as pltpu

F_PAD = 128          # every feature width padded to one 128-lane register width
NUM_LAYERS = 3


def _gcn_kernel(a_ref, x_ref, w_ref, b_ref, o_ref, *scratch,
                tile_m, resident):
    if resident:
        xw_vmem, a_vmem, a_sem = scratch
    else:
        (xw_vmem,) = scratch

    layer = pl.program_id(0)
    i = pl.program_id(1)                       # row-stripe index
    num_i = pl.num_programs(1)
    cur = layer % 2                            # xw ping-pong slot for this layer
    row0 = pl.multiple_of(i * tile_m, tile_m)

    if resident:
        def a_copy(idx):
            return pltpu.make_async_copy(a_ref.at[idx], a_vmem.at[idx],
                                         a_sem.at[idx])

    # One-time prologue: kick off the first A-stripe DMA, land X in the spare
    # xw slot (X never needs its own pipelined buffers) and compute
    # XW_0 = X @ W0 while that DMA is in flight.
    @pl.when(jnp.logical_and(layer == 0, i == 0))
    def _():
        if resident:
            a_copy(0).start()
        pltpu.sync_copy(x_ref, xw_vmem.at[1])
        xw_vmem[0] = jnp.dot(xw_vmem[1], w_ref[0],
                             preferred_element_type=jnp.float32
                             ).astype(xw_vmem.dtype)

    # Layer 0: stream A row stripes from HBM directly into the resident copy,
    # prefetching the next stripe before waiting on the current one.
    if resident:
        @pl.when(layer == 0)
        def _():
            @pl.when(i + 1 < num_i)
            def _():
                a_copy(i + 1).start()
            a_copy(i).wait()
        a_stripe = a_vmem[i]                   # (tile_m, n_pad) bf16, resident
    else:
        a_stripe = a_ref[...]                  # pipelined (tile_m, n_pad) stripe

    # Aggregation: one full-K MXU dot per row stripe, f32 accumulation.
    acc = jnp.dot(a_stripe, xw_vmem[cur], preferred_element_type=jnp.float32)
    h = acc + b_ref[layer]                     # (tile_m, F_PAD) f32

    # Hidden layers: ReLU fused with the NEXT layer's feature transform for
    # this row stripe, so the next layer starts with its XW already resident.
    @pl.when(layer < NUM_LAYERS - 1)
    def _():
        h_act = jnp.maximum(h, 0.0).astype(jnp.bfloat16)
        xw_next = jnp.dot(h_act, w_ref[layer + 1],
                          preferred_element_type=jnp.float32)
        xw_vmem[1 - cur, pl.ds(row0, tile_m), :] = xw_next.astype(xw_vmem.dtype)

    # Output layer: logits (no ReLU), written once, lane-dense f32.
    @pl.when(layer == NUM_LAYERS - 1)
    def _():
        o_ref[...] = h


def _round_up(x, m):
    return ((x + m - 1) // m) * m


def _vmem_capacity_bytes():
    try:
        info = pltpu.get_tpu_info()
        cap = int(getattr(info, "vmem_capacity_bytes", 0))
        if cap > 0:
            return cap
    except Exception:
        pass
    return 64 * 1024 * 1024        # conservative default (v7x per-TensorCore)


def gcn_forward(a_norm, x, params, *, tile_nodes=None, force_streaming=False):
    """Fused 3-layer GCN forward.  a_norm: (N, N) f32, x: (N, in_feats) f32."""
    n = a_norm.shape[0]
    assert a_norm.shape == (n, n)
    assert len(params) == NUM_LAYERS
    (w1, _), (w2, _), (w3, _) = params
    in_feats = w1.shape[0]
    num_classes = w3.shape[1]
    assert x.shape == (n, in_feats)
    assert w2.shape[0] == w1.shape[1] and w3.shape[0] == w2.shape[1]
    assert max(in_feats, w1.shape[1], w2.shape[1], num_classes) <= F_PAD

    # ---- tile selection: degenerate grid for small graphs, 512-row stripes
    # otherwise (big MXU-friendly dots, few grid steps) ------------------------
    if tile_nodes is None:
        tile_nodes = _round_up(n, 256) if n <= 1024 else 512
    tm = _round_up(max(tile_nodes, 8), 8)
    n_pad = _round_up(n, tm)
    n_tiles = n_pad // tm

    # ---- generation-aware VMEM plan: resident A vs streamed-A fallback ------
    capacity = _vmem_capacity_bytes()

    def vmem_needed(res):
        a = n_pad * n_pad * 2 if res else 2 * tm * n_pad * 2
        xw = 2 * n_pad * F_PAD * 2
        wts = 2 * NUM_LAYERS * F_PAD * F_PAD * 2 + 2 * NUM_LAYERS * F_PAD * 4
        out = 2 * tm * F_PAD * 4
        return a + xw + wts + out

    budget = capacity - 8 * 1024 * 1024
    resident = (not force_streaming) and vmem_needed(True) <= budget
    if not resident:
        while tm > 256 and vmem_needed(False) > budget:
            tm //= 2
            n_pad = _round_up(n, tm)
            n_tiles = n_pad // tm
    vmem_limit = int(min(capacity,
                         max(vmem_needed(resident) + 8 * 1024 * 1024,
                             32 * 1024 * 1024)))

    # ---- pad / cast (plain-JAX glue) -----------------------------------------
    a_pad = jnp.zeros((n_pad, n_pad), jnp.bfloat16).at[:n, :n].set(
        a_norm.astype(jnp.bfloat16))
    x_pad = jnp.zeros((n_pad, F_PAD), jnp.bfloat16).at[:n, :in_feats].set(
        x.astype(jnp.bfloat16))
    w_stack = jnp.zeros((NUM_LAYERS, F_PAD, F_PAD), jnp.bfloat16)
    b_stack = jnp.zeros((NUM_LAYERS, 1, F_PAD), jnp.float32)
    for l, (w, b) in enumerate(params):
        w_stack = w_stack.at[l, :w.shape[0], :w.shape[1]].set(
            w.astype(jnp.bfloat16))
        b_stack = b_stack.at[l, 0, :b.shape[0]].set(b.astype(jnp.float32))

    if resident:
        a_arg = a_pad.reshape(n_tiles, tm, n_pad)       # stripe-major for DMA
        a_spec = pl.BlockSpec(memory_space=pl.ANY)      # manual stripe DMAs
        extra_scratch = [pltpu.VMEM((n_tiles, tm, n_pad), jnp.bfloat16),
                         pltpu.SemaphoreType.DMA((n_tiles,))]
    else:
        a_arg = a_pad
        a_spec = pl.BlockSpec((tm, n_pad), lambda l, i: (i, 0))  # re-streamed
        extra_scratch = []

    grid = (NUM_LAYERS, n_tiles)
    kernel = functools.partial(_gcn_kernel, tile_m=tm, resident=resident)

    flops = NUM_LAYERS * (2 * n_pad * F_PAD * F_PAD + 2 * n_pad * n_pad * F_PAD)
    a_bytes = n_pad * n_pad * 2 * (1 if resident else NUM_LAYERS)
    bytes_accessed = (a_bytes + x_pad.size * 2 + w_stack.size * 2
                      + b_stack.size * 4 + n_pad * F_PAD * 4)

    out_pad = pl.pallas_call(
        kernel,
        out_shape=jax.ShapeDtypeStruct((n_pad, F_PAD), jnp.float32),
        grid_spec=pltpu.PrefetchScalarGridSpec(
            num_scalar_prefetch=0,
            grid=grid,
            in_specs=[
                a_spec,                                              # A
                pl.BlockSpec(memory_space=pl.ANY),                   # X (raw HBM)
                pl.BlockSpec((NUM_LAYERS, F_PAD, F_PAD),
                             lambda l, i: (0, 0, 0)),                # all W (resident)
                pl.BlockSpec((NUM_LAYERS, 1, F_PAD),
                             lambda l, i: (0, 0, 0)),                # all b (resident)
            ],
            # Output block index only advances during the last layer, so the
            # logits are written to HBM exactly once.
            out_specs=pl.BlockSpec(
                (tm, F_PAD),
                lambda l, i: (jnp.where(l == NUM_LAYERS - 1, i, 0), 0)),
            scratch_shapes=[pltpu.VMEM((2, n_pad, F_PAD), jnp.bfloat16)]
                           + extra_scratch,
        ),
        compiler_params=pltpu.CompilerParams(
            dimension_semantics=("arbitrary", "arbitrary"),
            vmem_limit_bytes=vmem_limit,
        ),
        cost_estimate=pl.CostEstimate(
            flops=flops, transcendentals=0, bytes_accessed=bytes_accessed),
    )(a_arg, x_pad, w_stack, b_stack)

    return out_pad[:n, :num_classes]


# ----------------------------- reference & setup -----------------------------

def gcn_reference(a_norm, x, params):
    """Pure-JAX reference mirroring the kernel's bf16-input / f32-accumulate
    precision (numerical sanity check)."""
    a = a_norm.astype(jnp.bfloat16)
    h = x.astype(jnp.bfloat16)
    out = None
    for layer, (w, b) in enumerate(params):
        xw = jnp.dot(h, w.astype(jnp.bfloat16),
                     preferred_element_type=jnp.float32).astype(jnp.bfloat16)
        out = jnp.dot(a, xw, preferred_element_type=jnp.float32) + b
        if layer < len(params) - 1:
            out = jnp.maximum(out, 0.0)
        h = out.astype(jnp.bfloat16)
    return out


def _glorot(key, fan_in, fan_out):
    limit = jnp.sqrt(6.0 / (fan_in + fan_out)).astype(jnp.float32)
    return jax.random.uniform(
        key, (fan_in, fan_out), dtype=jnp.float32, minval=-limit, maxval=limit)


def make_params(key, in_feats, h1_feats, h2_feats, num_classes):
    k1, k2, k3 = jax.random.split(key, 3)
    return (
        (_glorot(k1, in_feats, h1_feats), jnp.zeros((h1_feats,), jnp.float32)),
        (_glorot(k2, h1_feats, h2_feats), jnp.zeros((h2_feats,), jnp.float32)),
        (_glorot(k3, h2_feats, num_classes), jnp.zeros((num_classes,), jnp.float32)),
    )


def make_normalized_adjacency(key, n):
    """Random undirected graph with self-loops, symmetrically normalized."""
    a = (jax.random.uniform(key, (n, n)) < 0.1).astype(jnp.float32)
    a = jnp.maximum(a, a.T)                              # symmetrize
    a = jnp.maximum(a, jnp.eye(n, dtype=jnp.float32))    # add self-loops
    deg = jnp.sum(a, axis=1)
    d_inv_sqrt = 1.0 / jnp.sqrt(deg)
    return d_inv_sqrt[:, None] * a * d_inv_sqrt[None, :]


if __name__ == "__main__":
    N = 512
    IN_FEATS, H1_FEATS, H2_FEATS, NUM_CLASSES = 32, 32, 16, 8

    key = jax.random.PRNGKey(0)
    k_graph, k_feat, k_params = jax.random.split(key, 3)

    a_norm = make_normalized_adjacency(k_graph, N)
    x = jax.random.normal(k_feat, (N, IN_FEATS), dtype=jnp.float32)
    params = make_params(k_params, IN_FEATS, H1_FEATS, H2_FEATS, NUM_CLASSES)

    ref = gcn_reference(a_norm, x, params)

    # 1) Default path: degenerate grid (3, 1) with resident A.
    out = gcn_forward(a_norm, x, params)
    jax.block_until_ready(out)
    assert out.shape == (N, NUM_CLASSES)
    assert bool(jnp.isfinite(out).all())
    err = float(jnp.max(jnp.abs(out - ref)))
    assert err < 1e-2, f"resident/degenerate max abs error: {err}"

    # 2) Multi-stripe resident path (exercises manual A-stripe DMA prefetch and
    #    the per-stripe fused next-layer XW writes).
    out2 = gcn_forward(a_norm, x, params, tile_nodes=256)
    jax.block_until_ready(out2)
    err2 = float(jnp.max(jnp.abs(out2 - ref)))
    assert err2 < 1e-2, f"resident/tiled max abs error: {err2}"

    # 3) Streaming fallback (A re-read per layer through a pipelined BlockSpec),
    #    the path used when resident A would not fit VMEM (e.g. big N on v7x).
    out3 = gcn_forward(a_norm, x, params, tile_nodes=256, force_streaming=True)
    jax.block_until_ready(out3)
    err3 = float(jnp.max(jnp.abs(out3 - ref)))
    assert err3 < 1e-2, f"streaming max abs error: {err3}"

    print("KERNEL_OK")
</pallas_src>

<mosaic_0001>
module attributes {stable_mosaic.version = 11 : i64} {
  func.func @_gcn_kernel(%arg0: i32, %arg1: i32, %arg2: memref<1x512x512xbf16, #tpu.memory_space<any>>, %arg3: memref<512x128xbf16, #tpu.memory_space<any>>, %arg4: memref<3x128x128xbf16, #tpu.memory_space<vmem>>, %arg5: memref<3x1x128xf32, #tpu.memory_space<vmem>>, %arg6: memref<512x128xf32, #tpu.memory_space<vmem>>, %arg7: memref<2x512x128xbf16, #tpu.memory_space<vmem>>, %arg8: memref<1x512x512xbf16, #tpu.memory_space<vmem>>, %arg9: memref<1x!tpu.dma_semaphore, #tpu.memory_space<semaphore_mem>>) attributes {dimension_semantics = [#tpu.dimension_semantics<arbitrary>, #tpu.dimension_semantics<arbitrary>], iteration_bounds = array<i64: 3, 1>, scalar_prefetch = 0 : i64, scratch_operands = 3 : i64, tpu.core_type = #tpu.core_type<tc>, window_params = [{}, {}, {pipeline_mode = #tpu.pipeline_mode<synchronous>, transform_indices = @transform_2, window_bounds = array<i64: 3, 128, 128>}, {pipeline_mode = #tpu.pipeline_mode<synchronous>, transform_indices = @transform_3, window_bounds = array<i64: 3, 1, 128>}, {transform_indices = @transform_4, window_bounds = array<i64: 512, 128>}]} {
    %c2_i32 = arith.constant 2 : i32
    %c0_i32 = arith.constant 0 : i32
    %0 = arith.cmpi eq, %c2_i32, %c0_i32 : i32
    %c1_i32 = arith.constant 1 : i32
    %1 = arith.select %0, %c1_i32, %c2_i32 : i32
    %2 = arith.remsi %arg0, %1 : i32
    %c0_i32_0 = arith.constant 0 : i32
    %3 = arith.cmpi ne, %2, %c0_i32_0 : i32
    %c0_i32_1 = arith.constant 0 : i32
    %4 = arith.cmpi slt, %2, %c0_i32_1 : i32
    %c0_i32_2 = arith.constant 0 : i32
    %5 = arith.cmpi slt, %1, %c0_i32_2 : i32
    %6 = arith.xori %4, %5 : i1
    %7 = arith.andi %6, %3 : i1
    %8 = arith.addi %2, %1 : i32
    %9 = arith.select %7, %8, %2 : i32
    %c512_i32 = arith.constant 512 : i32
    %10 = arith.muli %arg1, %c512_i32 : i32
    %11 = tpu.assume_multiple %10, 512 : i32
    %c0_i32_3 = arith.constant 0 : i32
    %12 = arith.cmpi eq, %arg0, %c0_i32_3 : i32
    %c0_i32_4 = arith.constant 0 : i32
    %13 = arith.cmpi eq, %arg1, %c0_i32_4 : i32
    %14 = arith.andi %12, %13 : i1
    %15 = arith.extui %14 : i1 to i32
    %c0_i32_5 = arith.constant 0 : i32
    %16 = arith.cmpi ne, %15, %c0_i32_5 : i32
    scf.if %16 {
      %c0_i32_17 = arith.constant 0 : i32
      %c0_i32_18 = arith.constant 0 : i32
      %c0_i32_19 = arith.constant 0 : i32
      %c0_i32_20 = arith.constant 0 : i32
      %c0_i32_21 = arith.constant 0 : i32
      %38 = tpu.memref_slice %arg2[%c0_i32_17, %c0_i32_20, %c0_i32_21] : memref<1x512x512xbf16, #tpu.memory_space<any>> -> memref<1x512x512xbf16, #tpu.memory_space<any>>
      %39 = tpu.memref_squeeze %38 : memref<1x512x512xbf16, #tpu.memory_space<any>> -> memref<512x512xbf16, #tpu.memory_space<any>>
      %c0_i32_22 = arith.constant 0 : i32
      %c0_i32_23 = arith.constant 0 : i32
      %40 = tpu.memref_slice %arg8[%c0_i32_18, %c0_i32_22, %c0_i32_23] : memref<1x512x512xbf16, #tpu.memory_space<vmem>> -> memref<1x512x512xbf16, #tpu.memory_space<vmem>>
      %41 = tpu.memref_squeeze %40 : memref<1x512x512xbf16, #tpu.memory_space<vmem>> -> memref<512x512xbf16, #tpu.memory_space<vmem>>
      %42 = tpu.memref_slice %arg9[%c0_i32_19] : memref<1x!tpu.dma_semaphore, #tpu.memory_space<semaphore_mem>> -> memref<1x!tpu.dma_semaphore, #tpu.memory_space<semaphore_mem>>
      %43 = tpu.memref_squeeze %42 : memref<1x!tpu.dma_semaphore, #tpu.memory_space<semaphore_mem>> -> memref<!tpu.dma_semaphore, #tpu.memory_space<semaphore_mem>>
      tpu.enqueue_dma source(%39 : memref<512x512xbf16, #tpu.memory_space<any>>) target(%41 : memref<512x512xbf16, #tpu.memory_space<vmem>>) target_semaphore(%43 : memref<!tpu.dma_semaphore, #tpu.memory_space<semaphore_mem>>)
      %c1_i32_24 = arith.constant 1 : i32
      "tpu.region"() ({
        %53 = tpu.sem_alloc : memref<!tpu.dma_semaphore, #tpu.memory_space<semaphore_mem>>
        %c0_i32_34 = arith.constant 0 : i32
        %c0_i32_35 = arith.constant 0 : i32
        %54 = tpu.memref_slice %arg7[%c1_i32_24, %c0_i32_34, %c0_i32_35] : memref<2x512x128xbf16, #tpu.memory_space<vmem>> -> memref<1x512x128xbf16, #tpu.memory_space<vmem>>
        %55 = tpu.memref_squeeze %54 : memref<1x512x128xbf16, #tpu.memory_space<vmem>> -> memref<512x128xbf16, #tpu.memory_space<vmem>>
        tpu.enqueue_dma source(%arg3 : memref<512x128xbf16, #tpu.memory_space<any>>) target(%55 : memref<512x128xbf16, #tpu.memory_space<vmem>>) target_semaphore(%53 : memref<!tpu.dma_semaphore, #tpu.memory_space<semaphore_mem>>)
        %c0_i32_36 = arith.constant 0 : i32
        %c0_i32_37 = arith.constant 0 : i32
        %56 = tpu.memref_slice %arg7[%c1_i32_24, %c0_i32_36, %c0_i32_37] : memref<2x512x128xbf16, #tpu.memory_space<vmem>> -> memref<1x512x128xbf16, #tpu.memory_space<vmem>>
        %57 = tpu.memref_squeeze %56 : memref<1x512x128xbf16, #tpu.memory_space<vmem>> -> memref<512x128xbf16, #tpu.memory_space<vmem>>
        tpu.wait_dma2 semaphore(%53 : memref<!tpu.dma_semaphore, #tpu.memory_space<semaphore_mem>>) src(%arg3 : memref<512x128xbf16, #tpu.memory_space<any>>) dst(%57 : memref<512x128xbf16, #tpu.memory_space<vmem>>)
        tpu.yield
      }) : () -> ()
      %c1 = arith.constant 1 : index
      %c0_25 = arith.constant 0 : index
      %c0_26 = arith.constant 0 : index
      %44 = vector.load %arg7[%c1, %c0_25, %c0_26] : memref<2x512x128xbf16, #tpu.memory_space<vmem>>, vector<1x512x128xbf16>
      %45 = vector.shape_cast %44 : vector<1x512x128xbf16> to vector<512x128xbf16>
      %c0_27 = arith.constant 0 : index
      %c0_28 = arith.constant 0 : index
      %c0_29 = arith.constant 0 : index
      %46 = vector.load %arg4[%c0_27, %c0_28, %c0_29] : memref<3x128x128xbf16, #tpu.memory_space<vmem>>, vector<1x128x128xbf16>
      %47 = vector.shape_cast %46 : vector<1x128x128xbf16> to vector<128x128xbf16>
      %cst_30 = arith.constant dense<0.000000e+00> : vector<512x128xf32>
      %48 = tpu.matmul %45, %47, %cst_30 {dimension_numbers = #tpu.dot_dimension_numbers<[1], [0], [0], [1], [0, 0, 1, 1], [], []>} : vector<512x128xbf16>, vector<128x128xbf16>, vector<512x128xf32> -> vector<512x128xf32>
      %49 = arith.truncf %48 : vector<512x128xf32> to vector<512x128xbf16>
      %c0_31 = arith.constant 0 : index
      %c0_32 = arith.constant 0 : index
      %c0_33 = arith.constant 0 : index
      %50 = vector.load %arg7[%c0_31, %c0_32, %c0_33] : memref<2x512x128xbf16, #tpu.memory_space<vmem>>, vector<1x512x128xbf16>
      %51 = vector.shape_cast %50 : vector<1x512x128xbf16> to vector<512x128xbf16>
      %52 = vector.shape_cast %49 : vector<512x128xbf16> to vector<1x512x128xbf16>
      tpu.vector_store %arg7[%c0_31, %c0_32, %c0_33], %52 {strides = array<i32>} : memref<2x512x128xbf16, #tpu.memory_space<vmem>>, vector<1x512x128xbf16>,
    } else {
    }
    %c0_i32_6 = arith.constant 0 : i32
    %17 = arith.cmpi eq, %arg0, %c0_i32_6 : i32
    %18 = arith.extui %17 : i1 to i32
    %c0_i32_7 = arith.constant 0 : i32
    %19 = arith.cmpi ne, %18, %c0_i32_7 : i32
    scf.if %19 {
      %c1_i32_17 = arith.constant 1 : i32
      %38 = arith.addi %arg1, %c1_i32_17 : i32
      %c1_i32_18 = arith.constant 1 : i32
      %39 = arith.cmpi slt, %38, %c1_i32_18 : i32
      %40 = arith.extui %39 : i1 to i32
      %c0_i32_19 = arith.constant 0 : i32
      %41 = arith.cmpi ne, %40, %c0_i32_19 : i32
      scf.if %41 {
        %c1_i32_24 = arith.constant 1 : i32
        %48 = arith.addi %arg1, %c1_i32_24 : i32
        %c0_i32_25 = arith.constant 0 : i32
        %c0_i32_26 = arith.constant 0 : i32
        %49 = tpu.memref_slice %arg2[%48, %c0_i32_25, %c0_i32_26] : memref<1x512x512xbf16, #tpu.memory_space<any>> -> memref<1x512x512xbf16, #tpu.memory_space<any>>
        %50 = tpu.memref_squeeze %49 : memref<1x512x512xbf16, #tpu.memory_space<any>> -> memref<512x512xbf16, #tpu.memory_space<any>>
        %c0_i32_27 = arith.constant 0 : i32
        %c0_i32_28 = arith.constant 0 : i32
        %51 = tpu.memref_slice %arg8[%48, %c0_i32_27, %c0_i32_28] : memref<1x512x512xbf16, #tpu.memory_space<vmem>> -> memref<1x512x512xbf16, #tpu.memory_space<vmem>>
        %52 = tpu.memref_squeeze %51 : memref<1x512x512xbf16, #tpu.memory_space<vmem>> -> memref<512x512xbf16, #tpu.memory_space<vmem>>
        %53 = tpu.memref_slice %arg9[%48] : memref<1x!tpu.dma_semaphore, #tpu.memory_space<semaphore_mem>> -> memref<1x!tpu.dma_semaphore, #tpu.memory_space<semaphore_mem>>
        %54 = tpu.memref_squeeze %53 : memref<1x!tpu.dma_semaphore, #tpu.memory_space<semaphore_mem>> -> memref<!tpu.dma_semaphore, #tpu.memory_space<semaphore_mem>>
        tpu.enqueue_dma source(%50 : memref<512x512xbf16, #tpu.memory_space<any>>) target(%52 : memref<512x512xbf16, #tpu.memory_space<vmem>>) target_semaphore(%54 : memref<!tpu.dma_semaphore, #tpu.memory_space<semaphore_mem>>)
      } else {
      }
      %c0_i32_20 = arith.constant 0 : i32
      %c0_i32_21 = arith.constant 0 : i32
      %42 = tpu.memref_slice %arg2[%arg1, %c0_i32_20, %c0_i32_21] : memref<1x512x512xbf16, #tpu.memory_space<any>> -> memref<1x512x512xbf16, #tpu.memory_space<any>>
      %43 = tpu.memref_squeeze %42 : memref<1x512x512xbf16, #tpu.memory_space<any>> -> memref<512x512xbf16, #tpu.memory_space<any>>
      %c0_i32_22 = arith.constant 0 : i32
      %c0_i32_23 = arith.constant 0 : i32
      %44 = tpu.memref_slice %arg8[%arg1, %c0_i32_22, %c0_i32_23] : memref<1x512x512xbf16, #tpu.memory_space<vmem>> -> memref<1x512x512xbf16, #tpu.memory_space<vmem>>
      %45 = tpu.memref_squeeze %44 : memref<1x512x512xbf16, #tpu.memory_space<vmem>> -> memref<512x512xbf16, #tpu.memory_space<vmem>>
      %46 = tpu.memref_slice %arg9[%arg1] : memref<1x!tpu.dma_semaphore, #tpu.memory_space<semaphore_mem>> -> memref<1x!tpu.dma_semaphore, #tpu.memory_space<semaphore_mem>>
      %47 = tpu.memref_squeeze %46 : memref<1x!tpu.dma_semaphore, #tpu.memory_space<semaphore_mem>> -> memref<!tpu.dma_semaphore, #tpu.memory_space<semaphore_mem>>
      tpu.wait_dma2 semaphore(%47 : memref<!tpu.dma_semaphore, #tpu.memory_space<semaphore_mem>>) src(%43 : memref<512x512xbf16, #tpu.memory_space<any>>) dst(%45 : memref<512x512xbf16, #tpu.memory_space<vmem>>)
    } else {
    }
    %20 = arith.index_cast %arg1 : i32 to index
    %c0 = arith.constant 0 : index
    %c0_8 = arith.constant 0 : index
    %21 = vector.load %arg8[%20, %c0, %c0_8] : memref<1x512x512xbf16, #tpu.memory_space<vmem>>, vector<1x512x512xbf16>
    %22 = vector.shape_cast %21 : vector<1x512x512xbf16> to vector<512x512xbf16>
    %23 = arith.index_cast %9 : i32 to index
    %c0_9 = arith.constant 0 : index
    %c0_10 = arith.constant 0 : index
    %24 = vector.load %arg7[%23, %c0_9, %c0_10] : memref<2x512x128xbf16, #tpu.memory_space<vmem>>, vector<1x512x128xbf16>
    %25 = vector.shape_cast %24 : vector<1x512x128xbf16> to vector<512x128xbf16>
    %cst = arith.constant dense<0.000000e+00> : vector<512x128xf32>
    %26 = tpu.matmul %22, %25, %cst {dimension_numbers = #tpu.dot_dimension_numbers<[1], [0], [0], [1], [0, 0, 1, 1], [], []>} : vector<512x512xbf16>, vector<512x128xbf16>, vector<512x128xf32> -> vector<512x128xf32>
    %27 = arith.index_cast %arg0 : i32 to index
    %c0_11 = arith.constant 0 : index
    %c0_12 = arith.constant 0 : index
    %28 = vector.load %arg5[%27, %c0_11, %c0_12] : memref<3x1x128xf32, #tpu.memory_space<vmem>>, vector<1x1x128xf32>
    %29 = vector.shape_cast %28 : vector<1x1x128xf32> to vector<1x128xf32>
    %30 = vector.broadcast %29 : vector<1x128xf32> to vector<512x128xf32>
    %31 = arith.addf %26, %30 : vector<512x128xf32>
    %c2_i32_13 = arith.constant 2 : i32
    %32 = arith.cmpi slt, %arg0, %c2_i32_13 : i32
    %33 = arith.extui %32 : i1 to i32
    %c0_i32_14 = arith.constant 0 : i32
    %34 = arith.cmpi ne, %33, %c0_i32_14 : i32
    scf.if %34 {
      %cst_17 = arith.constant 0.000000e+00 : f32
      %38 = vector.broadcast %cst_17 : f32 to vector<512x128xf32>
      %39 = arith.maximumf %31, %38 : vector<512x128xf32>
      %40 = arith.truncf %39 : vector<512x128xf32> to vector<512x128xbf16>
      %c1_i32_18 = arith.constant 1 : i32
      %41 = arith.addi %arg0, %c1_i32_18 : i32
      %42 = arith.index_cast %41 : i32 to index
      %c0_19 = arith.constant 0 : index
      %c0_20 = arith.constant 0 : index
      %43 = vector.load %arg4[%42, %c0_19, %c0_20] : memref<3x128x128xbf16, #tpu.memory_space<vmem>>, vector<1x128x128xbf16>
      %44 = vector.shape_cast %43 : vector<1x128x128xbf16> to vector<128x128xbf16>
      %cst_21 = arith.constant dense<0.000000e+00> : vector<512x128xf32>
      %45 = tpu.matmul %40, %44, %cst_21 {dimension_numbers = #tpu.dot_dimension_numbers<[1], [0], [0], [1], [0, 0, 1, 1], [], []>} : vector<512x128xbf16>, vector<128x128xbf16>, vector<512x128xf32> -> vector<512x128xf32>
      %46 = arith.truncf %45 : vector<512x128xf32> to vector<512x128xbf16>
      %c1_i32_22 = arith.constant 1 : i32
      %47 = arith.subi %c1_i32_22, %9 : i32
      %48 = arith.index_cast %47 : i32 to index
      %49 = arith.index_cast %11 : i32 to index
      %c0_23 = arith.constant 0 : index
      %50 = vector.load %arg7[%48, %49, %c0_23] : memref<2x512x128xbf16, #tpu.memory_space<vmem>>, vector<1x512x128xbf16>
      %51 = vector.shape_cast %50 : vector<1x512x128xbf16> to vector<512x128xbf16>
      %52 = vector.shape_cast %46 : vector<512x128xbf16> to vector<1x512x128xbf16>
      tpu.vector_store %arg7[%48, %49, %c0_23], %52 {strides = array<i32>} : memref<2x512x128xbf16, #tpu.memory_space<vmem>>, vector<1x512x128xbf16>,
    } else {
    }
    %c2_i32_15 = arith.constant 2 : i32
    %35 = arith.cmpi eq, %arg0, %c2_i32_15 : i32
    %36 = arith.extui %35 : i1 to i32
    %c0_i32_16 = arith.constant 0 : i32
    %37 = arith.cmpi ne, %36, %c0_i32_16 : i32
    scf.if %37 {
      %c0_17 = arith.constant 0 : index
      %c0_18 = arith.constant 0 : index
      %38 = vector.load %arg6[%c0_17, %c0_18] : memref<512x128xf32, #tpu.memory_space<vmem>>, vector<512x128xf32>
      tpu.vector_store %arg6[%c0_17, %c0_18], %31 {strides = array<i32>} : memref<512x128xf32, #tpu.memory_space<vmem>>, vector<512x128xf32>,
    } else {
    }
    return
  }
  func.func @transform_2(%arg0: i32, %arg1: i32) -> (i32, i32, i32) {
    %c0_i32 = arith.constant 0 : i32
    %c0_i32_0 = arith.constant 0 : i32
    %c0_i32_1 = arith.constant 0 : i32
    %c0_i32_2 = arith.constant 0 : i32
    return %c0_i32, %c0_i32_0, %c0_i32_1 : i32, i32, i32
  }
  func.func @transform_3(%arg0: i32, %arg1: i32) -> (i32, i32, i32) {
    %c0_i32 = arith.constant 0 : i32
    %c0_i32_0 = arith.constant 0 : i32
    %c0_i32_1 = arith.constant 0 : i32
    %c0_i32_2 = arith.constant 0 : i32
    return %c0_i32, %c0_i32_0, %c0_i32_1 : i32, i32, i32
  }
  func.func @transform_4(%arg0: i32, %arg1: i32) -> (i32, i32) {
    %c2_i32 = arith.constant 2 : i32
    %0 = arith.cmpi eq, %arg0, %c2_i32 : i32
    %c0_i32 = arith.constant 0 : i32
    %1 = arith.select %0, %arg1, %c0_i32 : i32
    %c0_i32_0 = arith.constant 0 : i32
    %c0_i32_1 = arith.constant 0 : i32
    return %1, %c0_i32_0 : i32, i32
  }
}

</mosaic_0001>

<llo_original>
// kernel: tpu_custom_call.1
$region0: #{tpu_custom_call.1}
  #allocation0 [shape = 'u32[]', space=smem, size = 0x4, offset = 0x4, fixed_abs, tag = 'smem constant byte address 0x4 - core index']
  #allocation1 [shape = 'u32[144,128]{1,0:T(1,128)}', space=vmem, size = 0x12000, scoped, tag = 'internal scratch']
  #allocation2 [shape = 'bf16[2,512,128]{2,1,0:T(16,128)(2,1)}', space=vmem, size = 0x40000, scoped, tag = 'scratch operand']
  #allocation3 [shape = 'bf16[1,512,512]{2,1,0:T(16,128)(2,1)}', space=vmem, size = 0x80000, scoped, tag = 'scratch operand']
  #allocation4 [shape = 's32[1]{0}', space=sflag, size = 0x4, scoped, tag = 'scratch operand']
  #allocation9 [shape = 's32[]', space=sflag, size = 0x4, offset = 0, fixed_abs, tag = 'sflag constant byte address 0x0 - dummy sync flag']
  #allocation12 [shape = 's32[]', space=sflag, size = 0x4, offset = 0, fixed_abs, tag = 'sflag constant byte address 0x0 - dummy sync flag']
  #allocation13 [shape = 's32[]', space=sflag, size = 0x4, offset = 0, fixed_abs, tag = 'sflag constant byte address 0x0 - dummy sync flag']
  #allocation14 [shape = 'u32[]', space=smem, size = 0x4, offset = 0x44, fixed_abs, tag = 'smem constant byte address 0x44 - assertion arg 0']
  #allocation15 [shape = 'u32[]', space=smem, size = 0x4, offset = 0x48, fixed_abs, tag = 'smem constant byte address 0x48 - assertion arg 1']
  #allocation16 [shape = 's32[]', space=sflag, size = 0x4, offset = 0, fixed_abs, tag = 'sflag constant byte address 0x0 - dummy sync flag']
  %s0 = inlined_call_operand.hbm [shape: bf16[1,512,512], index: 0, kind: input, shape index: {}]
  %s1 = inlined_call_operand.hbm [shape: bf16[512,128], index: 1, kind: input, shape index: {}]
  %s2 = inlined_call_operand.hbm [shape: bf16[3,128,128], index: 2, kind: input, shape index: {}]
  %s3 = inlined_call_operand.vmem [shape: f32[3,1,128], index: 3, kind: input, shape index: {}]
  %s4 = inlined_call_operand.hbm [shape: f32[512,128], index: 4, kind: output, shape index: {}]
  %s5 = sld [smem:[#allocation0]]
  $region70: #{tpu_custom_call.1} parent=0
    _
  %s7 = ssub.s32 1, %s5
  %s8 = scalar_select 0, %s7, %s5
  $region1: #{tpu_custom_call.1} parent=0
    #allocation5 [shape = 'u8[98304]{0}', space=vmem, size = 0x18000, scoped, tag = 'input window, operand 2, single buffered']
    #allocation6 [shape = 's32[2]{0}', space=sflag, size = 0x8, scoped, tag = 'scoped memory for tpu_custom_call.1']
    #allocation7 [shape = 's32[2]{0}', space=sflag, size = 0x8, scoped, tag = 'scoped memory for tpu_custom_call.1']
    #allocation8 [shape = 'u8[524288]{0}', space=vmem, size = 0x80000, scoped, tag = 'output window, operand 0']
    %9 = vsyncpa [#allocation6], 0
    %10 = vsyncpa [#allocation7], 0
    %s11 = scalar_lea.sflag [#allocation7], 1
    %12 = vsyncpa %s11, 0
    loop: start=0, step=1, limit=5
    $region2: #{tpu_custom_call.1} parent=1 // loop_pre_header
      _
    $region3: #{tpu_custom_call.1} parent=1 // loop_header
      %s14 = sphi 0, %s18
      %p15 = scmp.ge.s32.totalorder %s14, 5
      %s21 = sphi 0, %s33
      %s22 = sphi 0, %s29
      %s23 = sphi 0, %s21
      %s24 = sphi 0, %s22
      %s25 = sphi 0, %s23
      %s26 = sphi 0, %s24
      %s34 = sphi 0, %s34
      %s36 = sphi 0, %s34
      %s37 = sphi 0, %s36
      %s51 = sphi 0, %s37
      %s55 = sphi 0, %s55
      %s57 = sphi 0, %s55
      %s58 = sphi 0, %s57
      %s72 = sphi 0, %s58
      %s82 = sphi 0, %s84
      %s85 = sphi 0, %s82
      %s86 = sphi 0, %s85
      %s102 = sphi 0, %s86
    $region4: #{tpu_custom_call.1} parent=1 // loop_header_branch
      %17 = sbr.rel (%p15) target = $region8
    $region5: #{tpu_custom_call.1} parent=1 // loop_body
      %s19 = ssub.s32 %s14, 1
      %s20 = ssub.s32 %s14, 2
      %s27 = sadd.s32 1, %s22
      %p28 = scmp.ge.s32.totalorder %s27, 1
      %s29 = scalar_select %p28, 0, %s27
      %s30 = sadd.s32 1, %s21
      %s31 = scalar_select %p28, %s30, %s21
      %p32 = scmp.ge.s32.totalorder %s31, 3
      %s33 = scalar_select %p32, 0, %s31
      %s35 = sadd.s32 %s34, 1
      %p38 = scmp.eq.s32.totalorder %s14, 2
      %p39 = scmp.ne.s32.totalorder %s34, %s36
      %p40 = scmp.eq.s32.totalorder %s14, 0
      %p41 = por %p39, %p40
      %p42 = scmp.ne.s32.totalorder %s34, %s36
      %p43 = scmp.eq.s32.totalorder %s19, 2
      %p44 = por %p42, %p43
      %p45 = scmp.ne.s32.totalorder %s36, %s37
      %p46 = scmp.eq.s32.totalorder %s19, 0
      %p47 = por %p45, %p46
      %p48 = scmp.ne.s32.totalorder %s36, %s37
      %p49 = scmp.eq.s32.totalorder %s20, 2
      %p50 = por %p48, %p49
      %p52 = scmp.ne.s32.totalorder %s37, %s51
      %p53 = scmp.eq.s32.totalorder %s20, 0
      %p54 = por %p52, %p53
      %s56 = sadd.s32 %s55, 1
      %p59 = scmp.eq.s32.totalorder %s14, 2
      %p60 = scmp.ne.s32.totalorder %s55, %s57
      %p61 = scmp.eq.s32.totalorder %s14, 0
      %p62 = por %p60, %p61
      %p63 = scmp.ne.s32.totalorder %s55, %s57
      %p64 = scmp.eq.s32.totalorder %s19, 2
      %p65 = por %p63, %p64
      %p66 = scmp.ne.s32.totalorder %s57, %s58
      %p67 = scmp.eq.s32.totalorder %s19, 0
      %p68 = por %p66, %p67
      %p69 = scmp.ne.s32.totalorder %s57, %s58
      %p70 = scmp.eq.s32.totalorder %s20, 2
      %p71 = por %p69, %p70
      %p73 = scmp.ne.s32.totalorder %s58, %s72
      %p74 = scmp.eq.s32.totalorder %s20, 0
      %p75 = por %p73, %p74
      %p76 = scmp.eq.s32.totalorder %s21, 2
      %s77 = scalar_select %p76, %s22, 0
      %p78 = scmp.eq.s32.totalorder %s33, 2
      %s79 = scalar_select %p78, %s29, 0
      %s80 = ssub.s32 %s77, %s79
      %p81 = scmp.eq.s32.totalorder %s80, 0
      %s83 = sadd.s32 %s82, 1
      %s84 = scalar_select %p81, %s82, %s83
      %p87 = pneg %p81
      %p88 = scmp.eq.s32.totalorder %s14, 2
      %p89 = por %p87, %p88
      %p90 = scmp.ne.s32.totalorder %s82, %s85
      %p91 = scmp.eq.s32.totalorder %s14, 0
      %p92 = por %p90, %p91
      %p93 = scmp.ne.s32.totalorder %s82, %s85
      %p94 = scmp.eq.s32.totalorder %s19, 2
      %p95 = por %p93, %p94
      %p96 = scmp.ne.s32.totalorder %s85, %s86
      %p97 = scmp.eq.s32.totalorder %s19, 0
      %p98 = por %p96, %p97
      %p99 = scmp.ne.s32.totalorder %s85, %s86
      %p100 = scmp.eq.s32.totalorder %s20, 2
      %p101 = por %p99, %p100
      %p103 = scmp.ne.s32.totalorder %s86, %s102
      %p104 = scmp.eq.s32.totalorder %s20, 0
      %p105 = por %p103, %p104
      %p106 = scmp.le.s32.totalorder 1, %s14
      %p107 = scmp.lt.s32.totalorder %s14, 4
      %p108 = pnand %p106, %p107
      %p109 = pneg %p108
      // Predicated region
      $region9: #{tpu_custom_call.1} parent=5 // pred_check
        _
      $region10: #{tpu_custom_call.1} parent=5 // pred_check_branch
        %111 = sbr.rel (%p108) target = $region12
      $region11: #{tpu_custom_call.1} parent=5 // pred_region
        %s112 = ssub.s32 %s14, 1
        // Predicated region
        $region13: #{tpu_custom_call.1} parent=11 // pred_check
          %p113 = pneg %p47
        $region14: #{tpu_custom_call.1} parent=11 // pred_check_branch
          %115 = sbr.rel (%p113) target = $region16
        $region15: #{tpu_custom_call.1} parent=11 // pred_region
          %s117 = ssub.s32 3072, 3072
          %118 = vsyncadd [#allocation6], %s117
          %s119 = sshll.u32 [#allocation5], 4
          %s120 = int_to_ptr.vmem [resolvable:$true] %s119
          %125 = dma.hbm_to_vmem [thread:$0]  %s2, 3072, %s120, [#allocation6], 64, 64, 4
        $region16: #{tpu_custom_call.1} parent=11 // pred_fallthru
          _
        // Predicated region
        $region17: #{tpu_custom_call.1} parent=11 // pred_check
          %p126 = pneg %p68
        $region18: #{tpu_custom_call.1} parent=11 // pred_check_branch
          %128 = sbr.rel (%p126) target = $region20
        $region19: #{tpu_custom_call.1} parent=11 // pred_region
          _
        $region20: #{tpu_custom_call.1} parent=11 // pred_fallthru
          _
      $region12: #{tpu_custom_call.1} parent=5 // pred_fallthru
        _
      %p129 = scmp.lt.s32.totalorder %s14, 3
      // Predicated region
      $region21: #{tpu_custom_call.1} parent=5 // pred_check
        %p130 = pneg %p129
      $region22: #{tpu_custom_call.1} parent=5 // pred_check_branch
        %132 = sbr.rel (%p130) target = $region24
      $region23: #{tpu_custom_call.1} parent=5 // pred_region
        _
      $region24: #{tpu_custom_call.1} parent=5 // pred_fallthru
        _
      %p133 = scmp.le.s32.totalorder 1, %s14
      %p134 = scmp.lt.s32.totalorder %s14, 4
      %p135 = pnand %p133, %p134
      %p136 = pneg %p135
      // Predicated region
      $region25: #{tpu_custom_call.1} parent=5 // pred_check
        _
      $region26: #{tpu_custom_call.1} parent=5 // pred_check_branch
        %138 = sbr.rel (%p135) target = $region28
      $region27: #{tpu_custom_call.1} parent=5 // pred_region
        %s139 = ssub.s32 %s14, 1
        // Predicated region
        $region29: #{tpu_custom_call.1} parent=27 // pred_check
          %p140 = pneg %p47
        $region30: #{tpu_custom_call.1} parent=27 // pred_check_branch
          %142 = sbr.rel (%p140) target = $region32
        $region31: #{tpu_custom_call.1} parent=27 // pred_region
          %143 = dma.done [#allocation6], 3072
        $region32: #{tpu_custom_call.1} parent=27 // pred_fallthru
          _
        %p144 = pneg %p47
        %p145 = pneg %p44
        %p146 = pneg %p68
        %p147 = pneg %p65
        %p148 = pneg %p98
        %p149 = pneg %p95
        %s150 = sand.u32 %s85, 1
        %s151 = scalar_lea.sflag [#allocation7], %s150
        %s152 = sand.u32 %s85, 1
        %s153 = smul.addr %s152, 512
        %s154 = scalar_lea.vmem [#allocation8], %s153
        %p155 = scmp.eq.s32.totalorder %s23, 2
        %s156 = scalar_select %p155, %s24, 0
        %s157 = smul.u32 64, %s156
        %p159 = scmp.lt.s32.totalorder %s23, 0
        %s160 = ssub.s32 0, %s23
        %s161 = scalar_select %p159, %s160, %s23
        %s162 = sand.u32 %s161, 1
        %s163 = ssub.s32 0, %s162
        %s164 = scalar_select %p159, %s163, %s162
        %p165 = scmp.ne.s32.totalorder %s164, 0
        %p166 = scmp.lt.s32.totalorder %s164, 0
        %p167 = pnand %p166, %p165
        %p168 = pneg %p167
        %s169 = sadd.s32 %s164, 2
        %s170 = scalar_select %p168, %s169, %s164
        %s171 = smul.u32 %s24, 512
        %p172 = scmp.eq.s32.totalorder %s23, 0
        %p173 = scmp.eq.s32.totalorder %s24, 0
        %p174 = pnand %p172, %p173
        %p175 = pneg %p174
        // Predicated region
        $region33: #{tpu_custom_call.1} parent=27 // pred_check
          _
        $region34: #{tpu_custom_call.1} parent=27 // pred_check_branch
          %177 = sbr.rel (%p174) target = $region36
        $region35: #{tpu_custom_call.1} parent=27 // pred_region
          #allocation10 [shape = 'u32[9]{0}', space=smem, size = 0x24, scoped, tag = 'DMA stride descriptor']
          %s179 = sshll.u32 1, 14
          %s180 = sxor.u32 4294967295, %s179
          %s182 = sld [smem:[#allocation0]]
          %s183 = sadd.s32 2, %s182
          %s185 = sshll.u32 7, 26
          %s186 = sxor.u32 4294967295, %s185
          %s187 = sand.u32 0, %s186
          %s188 = sshll.u32 %s183, 26
          %s189 = sor.u32 %s187, %s188
          %s190 = sshll.u32 [#allocation3], 4
          %s191 = int_to_ptr.vmem [resolvable:$true] %s190
          %194 = sst [smem:[#allocation10]] 512
          %s195 = scalar_lea.smem [#allocation10], 1
          %196 = sst [smem:[%s195]] 512
          %s197 = scalar_lea.smem [#allocation10], 2
          %198 = sst [smem:[%s197]] 4
          %s199 = scalar_lea.smem [#allocation10], 3
          %200 = sst [smem:[%s199]] 64
          %s201 = scalar_lea.smem [#allocation10], 4
          %202 = sst [smem:[%s201]] 128
          %s203 = scalar_lea.smem [#allocation10], 5
          %204 = sst [smem:[%s203]] 2
          %s205 = scalar_lea.smem [#allocation10], 6
          %206 = sst [smem:[%s205]] 256
          %s207 = scalar_lea.smem [#allocation10], 7
          %208 = sst [smem:[%s207]] 64
          %s209 = scalar_lea.smem [#allocation10], 8
          %210 = sst [smem:[%s209]] 4
          %212 = dma.general %s0, 16384, %s191, [#allocation4], [#allocation9], [#allocation10], %s189, 0
          $region37: #{tpu_custom_call.1} parent=35
            #allocation11 [shape = 's32[1]{0}', space=sflag, size = 0x4, scoped, tag = 'scoped memory for tpu_custom_call.1']
            %s213 = scalar_lea.vmem [#allocation2], 256
            // Predicated region
            $region38: #{tpu_custom_call.1} parent=37 // pred_check
              _
            $region39: #{tpu_custom_call.1} parent=37 // pred_check_branch
              %215 = sbr.rel target = $region41
            $region40: #{tpu_custom_call.1} parent=37 // pred_region
              %216 = sst [smem:[#allocation14]] [#allocation13]
              %217 = sst [smem:[#allocation15]] [#allocation12]
            $region41: #{tpu_custom_call.1} parent=37 // pred_fallthru
              _
            %219 = shalt.err (0)
            %s221 = sshll.u32 %s213, 4
            %s222 = int_to_ptr.vmem [resolvable:$true] %s221
            %224 = dma.hbm_to_vmem [thread:$0]  %s1, 4096, %s222, [#allocation11]
            %s225 = smul.u32 4, 64
            %s226 = smul.u32 %s225, 1
            %s227 = sshll.u32 %s226, 4
            %228 = dma.done [#allocation11], %s227
          %s229 = scalar_lea.vmem [#allocation2], 256
          %v230 = vld [vmem:[%s229] sm:$0xff]
          %v231 = vld [vmem:[%s229 + $0x8] sm:$0xff]
          %v232 = vld [vmem:[%s229 + $0x10] sm:$0xff]
          %v233 = vld [vmem:[%s229 + $0x18] sm:$0xff]
          %v234 = vld [vmem:[%s229 + $0x20] sm:$0xff]
          %v235 = vld [vmem:[%s229 + $0x28] sm:$0xff]
          %v236 = vld [vmem:[%s229 + $0x30] sm:$0xff]
          %v237 = vld [vmem:[%s229 + $0x38] sm:$0xff]
          %v238 = vld [vmem:[%s229 + $0x40] sm:$0xff]
          %v239 = vld [vmem:[%s229 + $0x48] sm:$0xff]
          %v240 = vld [vmem:[%s229 + $0x50] sm:$0xff]
          %v241 = vld [vmem:[%s229 + $0x58] sm:$0xff]
          %v242 = vld [vmem:[%s229 + $0x60] sm:$0xff]
          %v243 = vld [vmem:[%s229 + $0x68] sm:$0xff]
          %v244 = vld [vmem:[%s229 + $0x70] sm:$0xff]
          %v245 = vld [vmem:[%s229 + $0x78] sm:$0xff]
          %v246 = vld [vmem:[%s229 + $0x80] sm:$0xff]
          %v247 = vld [vmem:[%s229 + $0x88] sm:$0xff]
          %v248 = vld [vmem:[%s229 + $0x90] sm:$0xff]
          %v249 = vld [vmem:[%s229 + $0x98] sm:$0xff]
          %v250 = vld [vmem:[%s229 + $0xa0] sm:$0xff]
          %v251 = vld [vmem:[%s229 + $0xa8] sm:$0xff]
          %v252 = vld [vmem:[%s229 + $0xb0] sm:$0xff]
          %v253 = vld [vmem:[%s229 + $0xb8] sm:$0xff]
          %v254 = vld [vmem:[%s229 + $0xc0] sm:$0xff]
          %v255 = vld [vmem:[%s229 + $0xc8] sm:$0xff]
          %v256 = vld [vmem:[%s229 + $0xd0] sm:$0xff]
          %v257 = vld [vmem:[%s229 + $0xd8] sm:$0xff]
          %v258 = vld [vmem:[%s229 + $0xe0] sm:$0xff]
          %v259 = vld [vmem:[%s229 + $0xe8] sm:$0xff]
          %v260 = vld [vmem:[%s229 + $0xf0] sm:$0xff]
          %v261 = vld [vmem:[%s229 + $0xf8] sm:$0xff]
          %v262 = vld [vmem:[#allocation5] sm:$0xf]
          %v263 = vld [vmem:[#allocation5 + $0x4] sm:$0xf]
          %v264 = vld [vmem:[#allocation5 + $0x8] sm:$0xf]
          %v265 = vld [vmem:[#allocation5 + $0xc] sm:$0xf]
          %v266 = vld [vmem:[#allocation5 + $0x10] sm:$0xf]
          %v267 = vld [vmem:[#allocation5 + $0x14] sm:$0xf]
          %v268 = vld [vmem:[#allocation5 + $0x18] sm:$0xf]
          %v269 = vld [vmem:[#allocation5 + $0x1c] sm:$0xf]
          %v270 = vld [vmem:[#allocation5 + $0x20] sm:$0xf]
          %v271 = vld [vmem:[#allocation5 + $0x24] sm:$0xf]
          %v272 = vld [vmem:[#allocation5 + $0x28] sm:$0xf]
          %v273 = vld [vmem:[#allocation5 + $0x2c] sm:$0xf]
          %v274 = vld [vmem:[#allocation5 + $0x30] sm:$0xf]
          %v275 = vld [vmem:[#allocation5 + $0x34] sm:$0xf]
          %v276 = vld [vmem:[#allocation5 + $0x38] sm:$0xf]
          %v277 = vld [vmem:[#allocation5 + $0x3c] sm:$0xf]
          %v294 = vunpack.c.l.b16 %v262
          %v295 = vunpack.c.l.b16 %v263
          %v296 = vunpack.c.l.b16 %v264
          %v297 = vunpack.c.l.b16 %v265
          %v298 = vunpack.c.l.b16 %v266
          %v299 = vunpack.c.l.b16 %v267
          %v300 = vunpack.c.l.b16 %v268
          %v301 = vunpack.c.l.b16 %v269
          %v302 = vunpack.c.l.b16 %v270
          %v303 = vunpack.c.l.b16 %v271
          %v304 = vunpack.c.l.b16 %v272
          %v305 = vunpack.c.l.b16 %v273
          %v306 = vunpack.c.l.b16 %v274
          %v307 = vunpack.c.l.b16 %v275
          %v308 = vunpack.c.l.b16 %v276
          %v309 = vunpack.c.l.b16 %v277
          %v310 = vpack.c.b16 %v295, %v294
          %v311 = vpack.c.b16 %v297, %v296
          %v312 = vpack.c.b16 %v299, %v298
          %v313 = vpack.c.b16 %v301, %v300
          %v314 = vpack.c.b16 %v303, %v302
          %v315 = vpack.c.b16 %v305, %v304
          %v316 = vpack.c.b16 %v307, %v306
          %v317 = vpack.c.b16 %v309, %v308
          %326 = vmatprep.subr.bf16.mxu0 0
          %327 = vmatpush1.bf16.msra.mxu0 %v310
          %328 = vmatprep.subr.bf16.mxu0 0
          %329 = vmatpush1.bf16.msra.mxu0 %v311
          %330 = vmatprep.subr.bf16.mxu0 0
          %331 = vmatpush1.bf16.msra.mxu0 %v312
          %332 = vmatprep.subr.bf16.mxu0 0
          %333 = vmatpush1.bf16.msra.mxu0 %v313
          %334 = vmatprep.subr.bf16.mxu0 0
          %335 = vmatpush1.bf16.msra.mxu0 %v314
          %336 = vmatprep.subr.bf16.mxu0 0
          %337 = vmatpush1.bf16.msra.mxu0 %v315
          %338 = vmatprep.subr.bf16.mxu0 0
          %339 = vmatpush1.bf16.msra.mxu0 %v316
          %340 = vmatprep.subr.bf16.mxu0 0
          %341 = vmatpush1.bf16.msra.mxu0 %v317
          %342 = vmatprep.subr.bf16.mxu0 0
          %343 = vmatpush1.bf16.msra.mxu0 0
          %344 = vmatprep.subr.bf16.mxu0 0
          %345 = vmatpush1.bf16.msra.mxu0 0
          %346 = vmatprep.subr.bf16.mxu0 0
          %347 = vmatpush1.bf16.msra.mxu0 0
          %348 = vmatprep.subr.bf16.mxu0 0
          %349 = vmatpush1.bf16.msra.mxu0 0
          %350 = vmatprep.subr.bf16.mxu0 0
          %351 = vmatpush1.bf16.msra.mxu0 0
          %352 = vmatprep.subr.bf16.mxu0 0
          %353 = vmatpush1.bf16.msra.mxu0 0
          %354 = vmatprep.subr.bf16.mxu0 0
          %355 = vmatpush1.bf16.msra.mxu0 0
          %356 = vmatprep.subr.bf16.mxu0 0
          %357 = vmatpush1.bf16.msra.mxu0 0
          %358 = vmatprep.mubr.bf16.mxu0 0
          %359 = vmatmul.mubr.bf16.gmra.mrb[0].mxu0 %v230
          %v360 = vpop.f32.mrb[0].mxu0
          %v361 = vadd.f32 0.0, %v360
          %v362 = vpop.f32.mrb[0].mxu0
          %v363 = vpop.f32.mrb[0].mxu0
          %v364 = vadd.f32 0.0, %v363
          %v365 = vpop.f32.mrb[0].mxu0
          %366 = vmatprep.mubr.bf16.mxu0 0
          %367 = vmatmul.mubr.bf16.gmra.mrb[0].mxu0 %v231
          %v368 = vpop.f32.mrb[0].mxu0
          %v369 = vadd.f32 0.0, %v368
          %v370 = vpop.f32.mrb[0].mxu0
          %v371 = vpop.f32.mrb[0].mxu0
          %v372 = vadd.f32 0.0, %v371
          %v373 = vpop.f32.mrb[0].mxu0
          %374 = vmatprep.mubr.bf16.mxu0 0
          %375 = vmatmul.mubr.bf16.gmra.mrb[0].mxu0 %v232
          %v376 = vpop.f32.mrb[0].mxu0
          %v377 = vadd.f32 0.0, %v376
          %v378 = vpop.f32.mrb[0].mxu0
          %v379 = vpop.f32.mrb[0].mxu0
          %v380 = vadd.f32 0.0, %v379
          %v381 = vpop.f32.mrb[0].mxu0
          %382 = vmatprep.mubr.bf16.mxu0 0
          %383 = vmatmul.mubr.bf16.gmra.mrb[0].mxu0 %v233
          %v384 = vpop.f32.mrb[0].mxu0
          %v385 = vadd.f32 0.0, %v384
          %v386 = vpop.f32.mrb[0].mxu0
          %v387 = vpop.f32.mrb[0].mxu0
          %v388 = vadd.f32 0.0, %v387
          %v389 = vpop.f32.mrb[0].mxu0
          %390 = vmatprep.mubr.bf16.mxu0 0
          %391 = vmatmul.mubr.bf16.gmra.mrb[0].mxu0 %v234
          %v392 = vpop.f32.mrb[0].mxu0
          %v393 = vadd.f32 0.0, %v392
          %v394 = vpop.f32.mrb[0].mxu0
          %v395 = vpop.f32.mrb[0].mxu0
          %v396 = vadd.f32 0.0, %v395
          %v397 = vpop.f32.mrb[0].mxu0
          %398 = vmatprep.mubr.bf16.mxu0 0
          %399 = vmatmul.mubr.bf16.gmra.mrb[0].mxu0 %v235
          %v400 = vpop.f32.mrb[0].mxu0
          %v401 = vadd.f32 0.0, %v400
          %v402 = vpop.f32.mrb[0].mxu0
          %v403 = vpop.f32.mrb[0].mxu0
          %v404 = vadd.f32 0.0, %v403
          %v405 = vpop.f32.mrb[0].mxu0
          %406 = vmatprep.mubr.bf16.mxu0 0
          %407 = vmatmul.mubr.bf16.gmra.mrb[0].mxu0 %v236
          %v408 = vpop.f32.mrb[0].mxu0
          %v409 = vadd.f32 0.0, %v408
          %v410 = vpop.f32.mrb[0].mxu0
          %v411 = vpop.f32.mrb[0].mxu0
          %v412 = vadd.f32 0.0, %v411
          %v413 = vpop.f32.mrb[0].mxu0
          %414 = vmatprep.mubr.bf16.mxu0 0
          %415 = vmatmul.mubr.bf16.gmra.mrb[0].mxu0 %v237
          %v416 = vpop.f32.mrb[0].mxu0
          %v417 = vadd.f32 0.0, %v416
          %v418 = vpop.f32.mrb[0].mxu0
          %v419 = vpop.f32.mrb[0].mxu0
          %v420 = vadd.f32 0.0, %v419
          %v421 = vpop.f32.mrb[0].mxu0
          %422 = vmatprep.mubr.bf16.mxu0 0
          %423 = vmatmul.mubr.bf16.gmra.mrb[0].mxu0 %v238
          %v424 = vpop.f32.mrb[0].mxu0
          %v425 = vadd.f32 0.0, %v424
          %v426 = vpop.f32.mrb[0].mxu0
          %v427 = vpop.f32.mrb[0].mxu0
          %v428 = vadd.f32 0.0, %v427
          %v429 = vpop.f32.mrb[0].mxu0
          %430 = vmatprep.mubr.bf16.mxu0 0
          %431 = vmatmul.mubr.bf16.gmra.mrb[0].mxu0 %v239
          %v432 = vpop.f32.mrb[0].mxu0
          %v433 = vadd.f32 0.0, %v432
          %v434 = vpop.f32.mrb[0].mxu0
          %v435 = vpop.f32.mrb[0].mxu0
          %v436 = vadd.f32 0.0, %v435
          %v437 = vpop.f32.mrb[0].mxu0
          %438 = vmatprep.mubr.bf16.mxu0 0
          %439 = vmatmul.mubr.bf16.gmra.mrb[0].mxu0 %v240
          %v440 = vpop.f32.mrb[0].mxu0
          %v441 = vadd.f32 0.0, %v440
          %v442 = vpop.f32.mrb[0].mxu0
          %v443 = vpop.f32.mrb[0].mxu0
          %v444 = vadd.f32 0.0, %v443
          %v445 = vpop.f32.mrb[0].mxu0
          %446 = vmatprep.mubr.bf16.mxu0 0
          %447 = vmatmul.mubr.bf16.gmra.mrb[0].mxu0 %v241
          %v448 = vpop.f32.mrb[0].mxu0
          %v449 = vadd.f32 0.0, %v448
          %v450 = vpop.f32.mrb[0].mxu0
          %v451 = vpop.f32.mrb[0].mxu0
          %v452 = vadd.f32 0.0, %v451
          %v453 = vpop.f32.mrb[0].mxu0
          %454 = vmatprep.mubr.bf16.mxu0 0
          %455 = vmatmul.mubr.bf16.gmra.mrb[0].mxu0 %v242
          %v456 = vpop.f32.mrb[0].mxu0
          %v457 = vadd.f32 0.0, %v456
          %v458 = vpop.f32.mrb[0].mxu0
          %v459 = vpop.f32.mrb[0].mxu0
          %v460 = vadd.f32 0.0, %v459
          %v461 = vpop.f32.mrb[0].mxu0
          %462 = vmatprep.mubr.bf16.mxu0 0
          %463 = vmatmul.mubr.bf16.gmra.mrb[0].mxu0 %v243
          %v464 = vpop.f32.mrb[0].mxu0
          %v465 = vadd.f32 0.0, %v464
          %v466 = vpop.f32.mrb[0].mxu0
          %v467 = vpop.f32.mrb[0].mxu0
          %v468 = vadd.f32 0.0, %v467
          %v469 = vpop.f32.mrb[0].mxu0
          %470 = vmatprep.mubr.bf16.mxu0 0
          %471 = vmatmul.mubr.bf16.gmra.mrb[0].mxu0 %v244
          %v472 = vpop.f32.mrb[0].mxu0
          %v473 = vadd.f32 0.0, %v472
          %v474 = vpop.f32.mrb[0].mxu0
          %v475 = vpop.f32.mrb[0].mxu0
          %v476 = vadd.f32 0.0, %v475
          %v477 = vpop.f32.mrb[0].mxu0
          %478 = vmatprep.mubr.bf16.mxu0 0
          %479 = vmatmul.mubr.bf16.gmra.mrb[0].mxu0 %v245
          %v480 = vpop.f32.mrb[0].mxu0
          %v481 = vadd.f32 0.0, %v480
          %v482 = vpop.f32.mrb[0].mxu0
          %v483 = vpop.f32.mrb[0].mxu0
          %v484 = vadd.f32 0.0, %v483
          %v485 = vpop.f32.mrb[0].mxu0
          %486 = vmatprep.mubr.bf16.mxu0 0
          %487 = vmatmul.mubr.bf16.gmra.mrb[0].mxu0 %v246
          %v488 = vpop.f32.mrb[0].mxu0
          %v489 = vadd.f32 0.0, %v488
          %v490 = vpop.f32.mrb[0].mxu0
          %v491 = vpop.f32.mrb[0].mxu0
          %v492 = vadd.f32 0.0, %v491
          %v493 = vpop.f32.mrb[0].mxu0
          %494 = vmatprep.mubr.bf16.mxu0 0
          %495 = vmatmul.mubr.bf16.gmra.mrb[0].mxu0 %v247
          %v496 = vpop.f32.mrb[0].mxu0
          %v497 = vadd.f32 0.0, %v496
          %v498 = vpop.f32.mrb[0].mxu0
          %v499 = vpop.f32.mrb[0].mxu0
          %v500 = vadd.f32 0.0, %v499
          %v501 = vpop.f32.mrb[0].mxu0
          %502 = vmatprep.mubr.bf16.mxu0 0
          %503 = vmatmul.mubr.bf16.gmra.mrb[0].mxu0 %v248
          %v504 = vpop.f32.mrb[0].mxu0
          %v505 = vadd.f32 0.0, %v504
          %v506 = vpop.f32.mrb[0].mxu0
          %v507 = vpop.f32.mrb[0].mxu0
          %v508 = vadd.f32 0.0, %v507
          %v509 = vpop.f32.mrb[0].mxu0
          %510 = vmatprep.mubr.bf16.mxu0 0
          %511 = vmatmul.mubr.bf16.gmra.mrb[0].mxu0 %v249
          %v512 = vpop.f32.mrb[0].mxu0
          %v513 = vadd.f32 0.0, %v512
          %v514 = vpop.f32.mrb[0].mxu0
          %v515 = vpop.f32.mrb[0].mxu0
          %v516 = vadd.f32 0.0, %v515
          %v517 = vpop.f32.mrb[0].mxu0
          %518 = vmatprep.mubr.bf16.mxu0 0
          %519 = vmatmul.mubr.bf16.gmra.mrb[0].mxu0 %v250
          %v520 = vpop.f32.mrb[0].mxu0
          %v521 = vadd.f32 0.0, %v520
          %v522 = vpop.f32.mrb[0].mxu0
          %v523 = vpop.f32.mrb[0].mxu0
          %v524 = vadd.f32 0.0, %v523
          %v525 = vpop.f32.mrb[0].mxu0
          %526 = vmatprep.mubr.bf16.mxu0 0
          %527 = vmatmul.mubr.bf16.gmra.mrb[0].mxu0 %v251
          %v528 = vpop.f32.mrb[0].mxu0
          %v529 = vadd.f32 0.0, %v528
          %v530 = vpop.f32.mrb[0].mxu0
          %v531 = vpop.f32.mrb[0].mxu0
          %v532 = vadd.f32 0.0, %v531
          %v533 = vpop.f32.mrb[0].mxu0
          %534 = vmatprep.mubr.bf16.mxu0 0
          %535 = vmatmul.mubr.bf16.gmra.mrb[0].mxu0 %v252
          %v536 = vpop.f32.mrb[0].mxu0
          %v537 = vadd.f32 0.0, %v536
          %v538 = vpop.f32.mrb[0].mxu0
          %v539 = vpop.f32.mrb[0].mxu0
          %v540 = vadd.f32 0.0, %v539
          %v541 = vpop.f32.mrb[0].mxu0
          %542 = vmatprep.mubr.bf16.mxu0 0
          %543 = vmatmul.mubr.bf16.gmra.mrb[0].mxu0 %v253
          %v544 = vpop.f32.mrb[0].mxu0
          %v545 = vadd.f32 0.0, %v544
          %v546 = vpop.f32.mrb[0].mxu0
          %v547 = vpop.f32.mrb[0].mxu0
          %v548 = vadd.f32 0.0, %v547
          %v549 = vpop.f32.mrb[0].mxu0
          %550 = vmatprep.mubr.bf16.mxu0 0
          %551 = vmatmul.mubr.bf16.gmra.mrb[0].mxu0 %v254
          %v552 = vpop.f32.mrb[0].mxu0
          %v553 = vadd.f32 0.0, %v552
          %v554 = vpop.f32.mrb[0].mxu0
          %v555 = vpop.f32.mrb[0].mxu0
          %v556 = vadd.f32 0.0, %v555
          %v557 = vpop.f32.mrb[0].mxu0
          %558 = vmatprep.mubr.bf16.mxu0 0
          %559 = vmatmul.mubr.bf16.gmra.mrb[0].mxu0 %v255
          %v560 = vpop.f32.mrb[0].mxu0
          %v561 = vadd.f32 0.0, %v560
          %v562 = vpop.f32.mrb[0].mxu0
          %v563 = vpop.f32.mrb[0].mxu0
          %v564 = vadd.f32 0.0, %v563
          %v565 = vpop.f32.mrb[0].mxu0
          %566 = vmatprep.mubr.bf16.mxu0 0
          %567 = vmatmul.mubr.bf16.gmra.mrb[0].mxu0 %v256
          %v568 = vpop.f32.mrb[0].mxu0
          %v569 = vadd.f32 0.0, %v568
          %v570 = vpop.f32.mrb[0].mxu0
          %v571 = vpop.f32.mrb[0].mxu0
          %v572 = vadd.f32 0.0, %v571
          %v573 = vpop.f32.mrb[0].mxu0
          %574 = vmatprep.mubr.bf16.mxu0 0
          %575 = vmatmul.mubr.bf16.gmra.mrb[0].mxu0 %v257
          %v576 = vpop.f32.mrb[0].mxu0
          %v577 = vadd.f32 0.0, %v576
          %v578 = vpop.f32.mrb[0].mxu0
          %v579 = vpop.f32.mrb[0].mxu0
          %v580 = vadd.f32 0.0, %v579
          %v581 = vpop.f32.mrb[0].mxu0
          %582 = vmatprep.mubr.bf16.mxu0 0
          %583 = vmatmul.mubr.bf16.gmra.mrb[0].mxu0 %v258
          %v584 = vpop.f32.mrb[0].mxu0
          %v585 = vadd.f32 0.0, %v584
          %v586 = vpop.f32.mrb[0].mxu0
          %v587 = vpop.f32.mrb[0].mxu0
          %v588 = vadd.f32 0.0, %v587
          %v589 = vpop.f32.mrb[0].mxu0
          %590 = vmatprep.mubr.bf16.mxu0 0
          %591 = vmatmul.mubr.bf16.gmra.mrb[0].mxu0 %v259
          %v592 = vpop.f32.mrb[0].mxu0
          %v593 = vadd.f32 0.0, %v592
          %v594 = vpop.f32.mrb[0].mxu0
          %v595 = vpop.f32.mrb[0].mxu0
          %v596 = vadd.f32 0.0, %v595
          %v597 = vpop.f32.mrb[0].mxu0
          %598 = vmatprep.mubr.bf16.mxu0 0
          %599 = vmatmul.mubr.bf16.gmra.mrb[0].mxu0 %v260
          %v600 = vpop.f32.mrb[0].mxu0
          %v601 = vadd.f32 0.0, %v600
          %v602 = vpop.f32.mrb[0].mxu0
          %v603 = vpop.f32.mrb[0].mxu0
          %v604 = vadd.f32 0.0, %v603
          %v605 = vpop.f32.mrb[0].mxu0
          %606 = vmatprep.mubr.bf16.mxu0 0
          %607 = vmatmul.mubr.bf16.gmra.mrb[0].mxu0 %v261
          %v608 = vpop.f32.mrb[0].mxu0
          %v609 = vadd.f32 0.0, %v608
          %v610 = vpop.f32.mrb[0].mxu0
          %v611 = vpop.f32.mrb[0].mxu0
          %v612 = vadd.f32 0.0, %v611
          %v613 = vpop.f32.mrb[0].mxu0
          %614 = vdwg.mxu0
          %v615 = vpack.c.bf16 %v364, %v361
          %v616 = vpack.c.bf16 %v372, %v369
          %v617 = vpack.c.bf16 %v380, %v377
          %v618 = vpack.c.bf16 %v388, %v385
          %v619 = vpack.c.bf16 %v396, %v393
          %v620 = vpack.c.bf16 %v404, %v401
          %v621 = vpack.c.bf16 %v412, %v409
          %v622 = vpack.c.bf16 %v420, %v417
          %v623 = vpack.c.bf16 %v428, %v425
          %v624 = vpack.c.bf16 %v436, %v433
          %v625 = vpack.c.bf16 %v444, %v441
          %v626 = vpack.c.bf16 %v452, %v449
          %v627 = vpack.c.bf16 %v460, %v457
          %v628 = vpack.c.bf16 %v468, %v465
          %v629 = vpack.c.bf16 %v476, %v473
          %v630 = vpack.c.bf16 %v484, %v481
          %v631 = vpack.c.bf16 %v492, %v489
          %v632 = vpack.c.bf16 %v500, %v497
          %v633 = vpack.c.bf16 %v508, %v505
          %v634 = vpack.c.bf16 %v516, %v513
          %v635 = vpack.c.bf16 %v524, %v521
          %v636 = vpack.c.bf16 %v532, %v529
          %v637 = vpack.c.bf16 %v540, %v537
          %v638 = vpack.c.bf16 %v548, %v545
          %v639 = vpack.c.bf16 %v556, %v553
          %v640 = vpack.c.bf16 %v564, %v561
          %v641 = vpack.c.bf16 %v572, %v569
          %v642 = vpack.c.bf16 %v580, %v577
          %v643 = vpack.c.bf16 %v588, %v585
          %v644 = vpack.c.bf16 %v596, %v593
          %v645 = vpack.c.bf16 %v604, %v601
          %v646 = vpack.c.bf16 %v612, %v609
          %647 = vst [vmem:[#allocation2] sm:$0xff] %v615
          %648 = vst [vmem:[#allocation2 + $0x8] sm:$0xff] %v616
          %649 = vst [vmem:[#allocation2 + $0x10] sm:$0xff] %v617
          %650 = vst [vmem:[#allocation2 + $0x18] sm:$0xff] %v618
          %651 = vst [vmem:[#allocation2 + $0x20] sm:$0xff] %v619
          %652 = vst [vmem:[#allocation2 + $0x28] sm:$0xff] %v620
          %653 = vst [vmem:[#allocation2 + $0x30] sm:$0xff] %v621
          %654 = vst [vmem:[#allocation2 + $0x38] sm:$0xff] %v622
          %655 = vst [vmem:[#allocation2 + $0x40] sm:$0xff] %v623
          %656 = vst [vmem:[#allocation2 + $0x48] sm:$0xff] %v624
          %657 = vst [vmem:[#allocation2 + $0x50] sm:$0xff] %v625
          %658 = vst [vmem:[#allocation2 + $0x58] sm:$0xff] %v626
          %659 = vst [vmem:[#allocation2 + $0x60] sm:$0xff] %v627
          %660 = vst [vmem:[#allocation2 + $0x68] sm:$0xff] %v628
          %661 = vst [vmem:[#allocation2 + $0x70] sm:$0xff] %v629
          %662 = vst [vmem:[#allocation2 + $0x78] sm:$0xff] %v630
          %663 = vst [vmem:[#allocation2 + $0x80] sm:$0xff] %v631
          %664 = vst [vmem:[#allocation2 + $0x88] sm:$0xff] %v632
          %665 = vst [vmem:[#allocation2 + $0x90] sm:$0xff] %v633
          %666 = vst [vmem:[#allocation2 + $0x98] sm:$0xff] %v634
          %667 = vst [vmem:[#allocation2 + $0xa0] sm:$0xff] %v635
          %668 = vst [vmem:[#allocation2 + $0xa8] sm:$0xff] %v636
          %669 = vst [vmem:[#allocation2 + $0xb0] sm:$0xff] %v637
          %670 = vst [vmem:[#allocation2 + $0xb8] sm:$0xff] %v638
          %671 = vst [vmem:[#allocation2 + $0xc0] sm:$0xff] %v639
          %672 = vst [vmem:[#allocation2 + $0xc8] sm:$0xff] %v640
          %673 = vst [vmem:[#allocation2 + $0xd0] sm:$0xff] %v641
          %674 = vst [vmem:[#allocation2 + $0xd8] sm:$0xff] %v642
          %675 = vst [vmem:[#allocation2 + $0xe0] sm:$0xff] %v643
          %676 = vst [vmem:[#allocation2 + $0xe8] sm:$0xff] %v644
          %677 = vst [vmem:[#allocation2 + $0xf0] sm:$0xff] %v645
          %678 = vst [vmem:[#allocation2 + $0xf8] sm:$0xff] %v646
        $region36: #{tpu_custom_call.1} parent=27 // pred_fallthru
          _
        // Predicated region
        $region42: #{tpu_custom_call.1} parent=27 // pred_check
          %p679 = pneg %p172
        $region43: #{tpu_custom_call.1} parent=27 // pred_check_branch
          %681 = sbr.rel (%p679) target = $region45
        $region44: #{tpu_custom_call.1} parent=27 // pred_region
          %s682 = sadd.s32 %s24, 1
          %p683 = scmp.lt.s32.totalorder %s682, 1
          // Predicated region
          $region46: #{tpu_custom_call.1} parent=44 // pred_check
            %p684 = pneg %p683
          $region47: #{tpu_custom_call.1} parent=44 // pred_check_branch
            %686 = sbr.rel (%p684) target = $region49
          $region48: #{tpu_custom_call.1} parent=44 // pred_region
            #allocation17 [shape = 'u32[9]{0}', space=smem, size = 0x24, scoped, tag = 'DMA stride descriptor']
            %s687 = smul.u32 %s682, 256
            %s688 = smul.addr %s687, 64
            %s689 = scalar_lea.hbm %s0, %s688
            %s690 = smul.u32 %s682, 128
            %s691 = smul.addr %s690, 8
            %s692 = scalar_lea.vmem [#allocation3], %s691
            %s693 = scalar_lea.sflag [#allocation4], %s682
            %s695 = sshll.u32 1, 14
            %s696 = sxor.u32 4294967295, %s695
            %s698 = sld [smem:[#allocation0]]
            %s699 = sadd.s32 2, %s698
            %s701 = sshll.u32 7, 26
            %s702 = sxor.u32 4294967295, %s701
            %s703 = sand.u32 0, %s702
            %s704 = sshll.u32 %s699, 26
            %s705 = sor.u32 %s703, %s704
            %s706 = sshll.u32 %s692, 4
            %s707 = int_to_ptr.vmem [resolvable:$true] %s706
            %710 = sst [smem:[#allocation17]] 512
            %s711 = scalar_lea.smem [#allocation17], 1
            %712 = sst [smem:[%s711]] 512
            %s713 = scalar_lea.smem [#allocation17], 2
            %714 = sst [smem:[%s713]] 4
            %s715 = scalar_lea.smem [#allocation17], 3
            %716 = sst [smem:[%s715]] 64
            %s717 = scalar_lea.smem [#allocation17], 4
            %718 = sst [smem:[%s717]] 128
            %s719 = scalar_lea.smem [#allocation17], 5
            %720 = sst [smem:[%s719]] 2
            %s721 = scalar_lea.smem [#allocation17], 6
            %722 = sst [smem:[%s721]] 256
            %s723 = scalar_lea.smem [#allocation17], 7
            %724 = sst [smem:[%s723]] 64
            %s725 = scalar_lea.smem [#allocation17], 8
            %726 = sst [smem:[%s725]] 4
            %728 = dma.general %s689, 16384, %s707, %s693, [#allocation16], [#allocation17], %s705, 0
          $region49: #{tpu_custom_call.1} parent=44 // pred_fallthru
            _
          %s729 = scalar_lea.sflag [#allocation4], %s24
          %s730 = smul.u32 4, 64
          %s731 = smul.u32 %s730, 4
          %s732 = sshll.u32 %s731, 4
          %733 = dma.done %s729, %s732
        $region45: #{tpu_custom_call.1} parent=27 // pred_fallthru
          _
        %s734 = smul.u32 %s24, 128
        %s735 = smul.addr %s734, 8
        %s736 = scalar_lea.vmem [#allocation3], %s735
        %v737 = vld [vmem:[%s736] sm:$0xff]
        %v738 = vld [vmem:[%s736 + $0x8] sm:$0xff]
        %v739 = vld [vmem:[%s736 + $0x10] sm:$0xff]
        %v740 = vld [vmem:[%s736 + $0x18] sm:$0xff]
        %v741 = vld [vmem:[%s736 + $0x20] sm:$0xff]
        %v742 = vld [vmem:[%s736 + $0x28] sm:$0xff]
        %v743 = vld [vmem:[%s736 + $0x30] sm:$0xff]
        %v744 = vld [vmem:[%s736 + $0x38] sm:$0xff]
        %v745 = vld [vmem:[%s736 + $0x40] sm:$0xff]
        %v746 = vld [vmem:[%s736 + $0x48] sm:$0xff]
        %v747 = vld [vmem:[%s736 + $0x50] sm:$0xff]
        %v748 = vld [vmem:[%s736 + $0x58] sm:$0xff]
        %v749 = vld [vmem:[%s736 + $0x60] sm:$0xff]
        %v750 = vld [vmem:[%s736 + $0x68] sm:$0xff]
        %v751 = vld [vmem:[%s736 + $0x70] sm:$0xff]
        %v752 = vld [vmem:[%s736 + $0x78] sm:$0xff]
        %v753 = vld [vmem:[%s736 + $0x80] sm:$0xff]
        %v754 = vld [vmem:[%s736 + $0x88] sm:$0xff]
        %v755 = vld [vmem:[%s736 + $0x90] sm:$0xff]
        %v756 = vld [vmem:[%s736 + $0x98] sm:$0xff]
        %v757 = vld [vmem:[%s736 + $0xa0] sm:$0xff]
        %v758 = vld [vmem:[%s736 + $0xa8] sm:$0xff]
        %v759 = vld [vmem:[%s736 + $0xb0] sm:$0xff]
        %v760 = vld [vmem:[%s736 + $0xb8] sm:$0xff]
        %v761 = vld [vmem:[%s736 + $0xc0] sm:$0xff]
        %v762 = vld [vmem:[%s736 + $0xc8] sm:$0xff]
        %v763 = vld [vmem:[%s736 + $0xd0] sm:$0xff]
        %v764 = vld [vmem:[%s736 + $0xd8] sm:$0xff]
        %v765 = vld [vmem:[%s736 + $0xe0] sm:$0xff]
        %v766 = vld [vmem:[%s736 + $0xe8] sm:$0xff]
        %v767 = vld [vmem:[%s736 + $0xf0] sm:$0xff]
        %v768 = vld [vmem:[%s736 + $0xf8] sm:$0xff]
        %v769 = vld [vmem:[%s736 + $0x100] sm:$0xff]
        %v770 = vld [vmem:[%s736 + $0x108] sm:$0xff]
        %v771 = vld [vmem:[%s736 + $0x110] sm:$0xff]
        %v772 = vld [vmem:[%s736 + $0x118] sm:$0xff]
        %v773 = vld [vmem:[%s736 + $0x120] sm:$0xff]
        %v774 = vld [vmem:[%s736 + $0x128] sm:$0xff]
        %v775 = vld [vmem:[%s736 + $0x130] sm:$0xff]
        %v776 = vld [vmem:[%s736 + $0x138] sm:$0xff]
        %v777 = vld [vmem:[%s736 + $0x140] sm:$0xff]
        %v778 = vld [vmem:[%s736 + $0x148] sm:$0xff]
        %v779 = vld [vmem:[%s736 + $0x150] sm:$0xff]
        %v780 = vld [vmem:[%s736 + $0x158] sm:$0xff]
        %v781 = vld [vmem:[%s736 + $0x160] sm:$0xff]
        %v782 = vld [vmem:[%s736 + $0x168] sm:$0xff]
        %v783 = vld [vmem:[%s736 + $0x170] sm:$0xff]
        %v784 = vld [vmem:[%s736 + $0x178] sm:$0xff]
        %v785 = vld [vmem:[%s736 + $0x180] sm:$0xff]
        %v786 = vld [vmem:[%s736 + $0x188] sm:$0xff]
        %v787 = vld [vmem:[%s736 + $0x190] sm:$0xff]
        %v788 = vld [vmem:[%s736 + $0x198] sm:$0xff]
        %v789 = vld [vmem:[%s736 + $0x1a0] sm:$0xff]
        %v790 = vld [vmem:[%s736 + $0x1a8] sm:$0xff]
        %v791 = vld [vmem:[%s736 + $0x1b0] sm:$0xff]
        %v792 = vld [vmem:[%s736 + $0x1b8] sm:$0xff]
        %v793 = vld [vmem:[%s736 + $0x1c0] sm:$0xff]
        %v794 = vld [vmem:[%s736 + $0x1c8] sm:$0xff]
        %v795 = vld [vmem:[%s736 + $0x1d0] sm:$0xff]
        %v796 = vld [vmem:[%s736 + $0x1d8] sm:$0xff]
        %v797 = vld [vmem:[%s736 + $0x1e0] sm:$0xff]
        %v798 = vld [vmem:[%s736 + $0x1e8] sm:$0xff]
        %v799 = vld [vmem:[%s736 + $0x1f0] sm:$0xff]
        %v800 = vld [vmem:[%s736 + $0x1f8] sm:$0xff]
        %v801 = vld [vmem:[%s736 + $0x200] sm:$0xff]
        %v802 = vld [vmem:[%s736 + $0x208] sm:$0xff]
        %v803 = vld [vmem:[%s736 + $0x210] sm:$0xff]
        %v804 = vld [vmem:[%s736 + $0x218] sm:$0xff]
        %v805 = vld [vmem:[%s736 + $0x220] sm:$0xff]
        %v806 = vld [vmem:[%s736 + $0x228] sm:$0xff]
        %v807 = vld [vmem:[%s736 + $0x230] sm:$0xff]
        %v808 = vld [vmem:[%s736 + $0x238] sm:$0xff]
        %v809 = vld [vmem:[%s736 + $0x240] sm:$0xff]
        %v810 = vld [vmem:[%s736 + $0x248] sm:$0xff]
        %v811 = vld [vmem:[%s736 + $0x250] sm:$0xff]
        %v812 = vld [vmem:[%s736 + $0x258] sm:$0xff]
        %v813 = vld [vmem:[%s736 + $0x260] sm:$0xff]
        %v814 = vld [vmem:[%s736 + $0x268] sm:$0xff]
        %v815 = vld [vmem:[%s736 + $0x270] sm:$0xff]
        %v816 = vld [vmem:[%s736 + $0x278] sm:$0xff]
        %v817 = vld [vmem:[%s736 + $0x280] sm:$0xff]
        %v818 = vld [vmem:[%s736 + $0x288] sm:$0xff]
        %v819 = vld [vmem:[%s736 + $0x290] sm:$0xff]
        %v820 = vld [vmem:[%s736 + $0x298] sm:$0xff]
        %v821 = vld [vmem:[%s736 + $0x2a0] sm:$0xff]
        %v822 = vld [vmem:[%s736 + $0x2a8] sm:$0xff]
        %v823 = vld [vmem:[%s736 + $0x2b0] sm:$0xff]
        %v824 = vld [vmem:[%s736 + $0x2b8] sm:$0xff]
        %v825 = vld [vmem:[%s736 + $0x2c0] sm:$0xff]
        %v826 = vld [vmem:[%s736 + $0x2c8] sm:$0xff]
        %v827 = vld [vmem:[%s736 + $0x2d0] sm:$0xff]
        %v828 = vld [vmem:[%s736 + $0x2d8] sm:$0xff]
        %v829 = vld [vmem:[%s736 + $0x2e0] sm:$0xff]
        %v830 = vld [vmem:[%s736 + $0x2e8] sm:$0xff]
        %v831 = vld [vmem:[%s736 + $0x2f0] sm:$0xff]
        %v832 = vld [vmem:[%s736 + $0x2f8] sm:$0xff]
        %v833 = vld [vmem:[%s736 + $0x300] sm:$0xff]
        %v834 = vld [vmem:[%s736 + $0x308] sm:$0xff]
        %v835 = vld [vmem:[%s736 + $0x310] sm:$0xff]
        %v836 = vld [vmem:[%s736 + $0x318] sm:$0xff]
        %v837 = vld [vmem:[%s736 + $0x320] sm:$0xff]
        %v838 = vld [vmem:[%s736 + $0x328] sm:$0xff]
        %v839 = vld [vmem:[%s736 + $0x330] sm:$0xff]
        %v840 = vld [vmem:[%s736 + $0x338] sm:$0xff]
        %v841 = vld [vmem:[%s736 + $0x340] sm:$0xff]
        %v842 = vld [vmem:[%s736 + $0x348] sm:$0xff]
        %v843 = vld [vmem:[%s736 + $0x350] sm:$0xff]
        %v844 = vld [vmem:[%s736 + $0x358] sm:$0xff]
        %v845 = vld [vmem:[%s736 + $0x360] sm:$0xff]
        %v846 = vld [vmem:[%s736 + $0x368] sm:$0xff]
        %v847 = vld [vmem:[%s736 + $0x370] sm:$0xff]
        %v848 = vld [vmem:[%s736 + $0x378] sm:$0xff]
        %v849 = vld [vmem:[%s736 + $0x380] sm:$0xff]
        %v850 = vld [vmem:[%s736 + $0x388] sm:$0xff]
        %v851 = vld [vmem:[%s736 + $0x390] sm:$0xff]
        %v852 = vld [vmem:[%s736 + $0x398] sm:$0xff]
        %v853 = vld [vmem:[%s736 + $0x3a0] sm:$0xff]
        %v854 = vld [vmem:[%s736 + $0x3a8] sm:$0xff]
        %v855 = vld [vmem:[%s736 + $0x3b0] sm:$0xff]
        %v856 = vld [vmem:[%s736 + $0x3b8] sm:$0xff]
        %v857 = vld [vmem:[%s736 + $0x3c0] sm:$0xff]
        %v858 = vld [vmem:[%s736 + $0x3c8] sm:$0xff]
        %v859 = vld [vmem:[%s736 + $0x3d0] sm:$0xff]
        %v860 = vld [vmem:[%s736 + $0x3d8] sm:$0xff]
        %v861 = vld [vmem:[%s736 + $0x3e0] sm:$0xff]
        %v862 = vld [vmem:[%s736 + $0x3e8] sm:$0xff]
        %v863 = vld [vmem:[%s736 + $0x3f0] sm:$0xff]
        %v864 = vld [vmem:[%s736 + $0x3f8] sm:$0xff]
        %s865 = smul.u32 %s170, 32
        %s866 = smul.addr %s865, 8
        %s867 = scalar_lea.vmem [#allocation2], %s866
        %v868 = vld [vmem:[%s867] sm:$0xff]
        %v869 = vld [vmem:[%s867 + $0x8] sm:$0xff]
        %v870 = vld [vmem:[%s867 + $0x10] sm:$0xff]
        %v871 = vld [vmem:[%s867 + $0x18] sm:$0xff]
        %v872 = vld [vmem:[%s867 + $0x20] sm:$0xff]
        %v873 = vld [vmem:[%s867 + $0x28] sm:$0xff]
        %v874 = vld [vmem:[%s867 + $0x30] sm:$0xff]
        %v875 = vld [vmem:[%s867 + $0x38] sm:$0xff]
        %v876 = vld [vmem:[%s867 + $0x40] sm:$0xff]
        %v877 = vld [vmem:[%s867 + $0x48] sm:$0xff]
        %v878 = vld [vmem:[%s867 + $0x50] sm:$0xff]
        %v879 = vld [vmem:[%s867 + $0x58] sm:$0xff]
        %v880 = vld [vmem:[%s867 + $0x60] sm:$0xff]
        %v881 = vld [vmem:[%s867 + $0x68] sm:$0xff]
        %v882 = vld [vmem:[%s867 + $0x70] sm:$0xff]
        %v883 = vld [vmem:[%s867 + $0x78] sm:$0xff]
        %v884 = vld [vmem:[%s867 + $0x80] sm:$0xff]
        %v885 = vld [vmem:[%s867 + $0x88] sm:$0xff]
        %v886 = vld [vmem:[%s867 + $0x90] sm:$0xff]
        %v887 = vld [vmem:[%s867 + $0x98] sm:$0xff]
        %v888 = vld [vmem:[%s867 + $0xa0] sm:$0xff]
        %v889 = vld [vmem:[%s867 + $0xa8] sm:$0xff]
        %v890 = vld [vmem:[%s867 + $0xb0] sm:$0xff]
        %v891 = vld [vmem:[%s867 + $0xb8] sm:$0xff]
        %v892 = vld [vmem:[%s867 + $0xc0] sm:$0xff]
        %v893 = vld [vmem:[%s867 + $0xc8] sm:$0xff]
        %v894 = vld [vmem:[%s867 + $0xd0] sm:$0xff]
        %v895 = vld [vmem:[%s867 + $0xd8] sm:$0xff]
        %v896 = vld [vmem:[%s867 + $0xe0] sm:$0xff]
        %v897 = vld [vmem:[%s867 + $0xe8] sm:$0xff]
        %v898 = vld [vmem:[%s867 + $0xf0] sm:$0xff]
        %v899 = vld [vmem:[%s867 + $0xf8] sm:$0xff]
        %s900 = scalar_lea.vmem %s3, %s23
        %v901 = vld [vmem:[%s900] sm:$0x1]
        %v903 = vlaneseq
        %v904 = vshrl.u32 %v903, 7
        %v905 = vsub.s32 0, %v904
        %v906 = vrot.slane %v901, %v905
        %908 = vmatprep.subr.bf16.mxu0 0
        %909 = vmatpush1.bf16.msra.mxu0 %v868
        %910 = vmatprep.subr.bf16.mxu0 0
        %911 = vmatpush1.bf16.msra.mxu0 %v869
        %912 = vmatprep.subr.bf16.mxu0 0
        %913 = vmatpush1.bf16.msra.mxu0 %v870
        %914 = vmatprep.subr.bf16.mxu0 0
        %915 = vmatpush1.bf16.msra.mxu0 %v871
        %916 = vmatprep.subr.bf16.mxu0 0
        %917 = vmatpush1.bf16.msra.mxu0 %v872
        %918 = vmatprep.subr.bf16.mxu0 0
        %919 = vmatpush1.bf16.msra.mxu0 %v873
        %920 = vmatprep.subr.bf16.mxu0 0
        %921 = vmatpush1.bf16.msra.mxu0 %v874
        %922 = vmatprep.subr.bf16.mxu0 0
        %923 = vmatpush1.bf16.msra.mxu0 %v875
        %924 = vmatprep.subr.bf16.mxu0 0
        %925 = vmatpush1.bf16.msra.mxu0 %v876
        %926 = vmatprep.subr.bf16.mxu0 0
        %927 = vmatpush1.bf16.msra.mxu0 %v877
        %928 = vmatprep.subr.bf16.mxu0 0
        %929 = vmatpush1.bf16.msra.mxu0 %v878
        %930 = vmatprep.subr.bf16.mxu0 0
        %931 = vmatpush1.bf16.msra.mxu0 %v879
        %932 = vmatprep.subr.bf16.mxu0 0
        %933 = vmatpush1.bf16.msra.mxu0 %v880
        %934 = vmatprep.subr.bf16.mxu0 0
        %935 = vmatpush1.bf16.msra.mxu0 %v881
        %936 = vmatprep.subr.bf16.mxu0 0
        %937 = vmatpush1.bf16.msra.mxu0 %v882
        %938 = vmatprep.subr.bf16.mxu0 0
        %939 = vmatpush1.bf16.msra.mxu0 %v883
        %940 = vmatprep.mubr.bf16.mxu0 %v738
        %941 = vmatmul.mubr.bf16.gmra.mrb[0].mxu0 %v737
        %v942 = vpop.f32.mrb[0].mxu0
        %v943 = vadd.f32 %v906, %v942
        %v944 = vpop.f32.mrb[0].mxu0
        %v945 = vpop.f32.mrb[0].mxu0
        %v946 = vadd.f32 %v906, %v945
        %v947 = vpop.f32.mrb[0].mxu0
        %948 = vmatprep.mubr.bf16.mxu0 %v742
        %949 = vmatmul.mubr.bf16.gmra.mrb[0].mxu0 %v741
        %v950 = vpop.f32.mrb[0].mxu0
        %v951 = vadd.f32 %v906, %v950
        %v952 = vpop.f32.mrb[0].mxu0
        %v953 = vpop.f32.mrb[0].mxu0
        %v954 = vadd.f32 %v906, %v953
        %v955 = vpop.f32.mrb[0].mxu0
        %956 = vmatprep.mubr.bf16.mxu0 %v746
        %957 = vmatmul.mubr.bf16.gmra.mrb[0].mxu0 %v745
        %v958 = vpop.f32.mrb[0].mxu0
        %v959 = vadd.f32 %v906, %v958
        %v960 = vpop.f32.mrb[0].mxu0
        %v961 = vpop.f32.mrb[0].mxu0
        %v962 = vadd.f32 %v906, %v961
        %v963 = vpop.f32.mrb[0].mxu0
        %964 = vmatprep.mubr.bf16.mxu0 %v750
        %965 = vmatmul.mubr.bf16.gmra.mrb[0].mxu0 %v749
        %v966 = vpop.f32.mrb[0].mxu0
        %v967 = vadd.f32 %v906, %v966
        %v968 = vpop.f32.mrb[0].mxu0
        %v969 = vpop.f32.mrb[0].mxu0
        %v970 = vadd.f32 %v906, %v969
        %v971 = vpop.f32.mrb[0].mxu0
        %972 = vmatprep.mubr.bf16.mxu0 %v754
        %973 = vmatmul.mubr.bf16.gmra.mrb[0].mxu0 %v753
        %v974 = vpop.f32.mrb[0].mxu0
        %v975 = vadd.f32 %v906, %v974
        %v976 = vpop.f32.mrb[0].mxu0
        %v977 = vpop.f32.mrb[0].mxu0
        %v978 = vadd.f32 %v906, %v977
        %v979 = vpop.f32.mrb[0].mxu0
        %980 = vmatprep.mubr.bf16.mxu0 %v758
        %981 = vmatmul.mubr.bf16.gmra.mrb[0].mxu0 %v757
        %v982 = vpop.f32.mrb[0].mxu0
        %v983 = vadd.f32 %v906, %v982
        %v984 = vpop.f32.mrb[0].mxu0
        %v985 = vpop.f32.mrb[0].mxu0
        %v986 = vadd.f32 %v906, %v985
        %v987 = vpop.f32.mrb[0].mxu0
        %988 = vmatprep.mubr.bf16.mxu0 %v762
        %989 = vmatmul.mubr.bf16.gmra.mrb[0].mxu0 %v761
        %v990 = vpop.f32.mrb[0].mxu0
        %v991 = vadd.f32 %v906, %v990
        %v992 = vpop.f32.mrb[0].mxu0
        %v993 = vpop.f32.mrb[0].mxu0
        %v994 = vadd.f32 %v906, %v993
        %v995 = vpop.f32.mrb[0].mxu0
        %996 = vmatprep.mubr.bf16.mxu0 %v766
        %997 = vmatmul.mubr.bf16.gmra.mrb[0].mxu0 %v765
        %v998 = vpop.f32.mrb[0].mxu0
        %v999 = vadd.f32 %v906, %v998
        %v1000 = vpop.f32.mrb[0].mxu0
        %v1001 = vpop.f32.mrb[0].mxu0
        %v1002 = vadd.f32 %v906, %v1001
        %v1003 = vpop.f32.mrb[0].mxu0
        %1004 = vmatprep.mubr.bf16.mxu0 %v770
        %1005 = vmatmul.mubr.bf16.gmra.mrb[0].mxu0 %v769
        %v1006 = vpop.f32.mrb[0].mxu0
        %v1007 = vadd.f32 %v906, %v1006
        %v1008 = vpop.f32.mrb[0].mxu0
        %v1009 = vpop.f32.mrb[0].mxu0
        %v1010 = vadd.f32 %v906, %v1009
        %v1011 = vpop.f32.mrb[0].mxu0
        %1012 = vmatprep.mubr.bf16.mxu0 %v774
        %1013 = vmatmul.mubr.bf16.gmra.mrb[0].mxu0 %v773
        %v1014 = vpop.f32.mrb[0].mxu0
        %v1015 = vadd.f32 %v906, %v1014
        %v1016 = vpop.f32.mrb[0].mxu0
        %v1017 = vpop.f32.mrb[0].mxu0
        %v1018 = vadd.f32 %v906, %v1017
        %v1019 = vpop.f32.mrb[0].mxu0
        %1020 = vmatprep.mubr.bf16.mxu0 %v778
        %1021 = vmatmul.mubr.bf16.gmra.mrb[0].mxu0 %v777
        %v1022 = vpop.f32.mrb[0].mxu0
        %v1023 = vadd.f32 %v906, %v1022
        %v1024 = vpop.f32.mrb[0].mxu0
        %v1025 = vpop.f32.mrb[0].mxu0
        %v1026 = vadd.f32 %v906, %v1025
        %v1027 = vpop.f32.mrb[0].mxu0
        %1028 = vmatprep.mubr.bf16.mxu0 %v782
        %1029 = vmatmul.mubr.bf16.gmra.mrb[0].mxu0 %v781
        %v1030 = vpop.f32.mrb[0].mxu0
        %v1031 = vadd.f32 %v906, %v1030
        %v1032 = vpop.f32.mrb[0].mxu0
        %v1033 = vpop.f32.mrb[0].mxu0
        %v1034 = vadd.f32 %v906, %v1033
        %v1035 = vpop.f32.mrb[0].mxu0
        %1036 = vmatprep.mubr.bf16.mxu0 %v786
        %1037 = vmatmul.mubr.bf16.gmra.mrb[0].mxu0 %v785
        %v1038 = vpop.f32.mrb[0].mxu0
        %v1039 = vadd.f32 %v906, %v1038
        %v1040 = vpop.f32.mrb[0].mxu0
        %v1041 = vpop.f32.mrb[0].mxu0
        %v1042 = vadd.f32 %v906, %v1041
        %v1043 = vpop.f32.mrb[0].mxu0
        %1044 = vmatprep.mubr.bf16.mxu0 %v790
        %1045 = vmatmul.mubr.bf16.gmra.mrb[0].mxu0 %v789
        %v1046 = vpop.f32.mrb[0].mxu0
        %v1047 = vadd.f32 %v906, %v1046
        %v1048 = vpop.f32.mrb[0].mxu0
        %v1049 = vpop.f32.mrb[0].mxu0
        %v1050 = vadd.f32 %v906, %v1049
        %v1051 = vpop.f32.mrb[0].mxu0
        %1052 = vmatprep.mubr.bf16.mxu0 %v794
        %1053 = vmatmul.mubr.bf16.gmra.mrb[0].mxu0 %v793
        %v1054 = vpop.f32.mrb[0].mxu0
        %v1055 = vadd.f32 %v906, %v1054
        %v1056 = vpop.f32.mrb[0].mxu0
        %v1057 = vpop.f32.mrb[0].mxu0
        %v1058 = vadd.f32 %v906, %v1057
        %v1059 = vpop.f32.mrb[0].mxu0
        %1060 = vmatprep.mubr.bf16.mxu0 %v798
        %1061 = vmatmul.mubr.bf16.gmra.mrb[0].mxu0 %v797
        %v1062 = vpop.f32.mrb[0].mxu0
        %v1063 = vadd.f32 %v906, %v1062
        %v1064 = vpop.f32.mrb[0].mxu0
        %v1065 = vpop.f32.mrb[0].mxu0
        %v1066 = vadd.f32 %v906, %v1065
        %v1067 = vpop.f32.mrb[0].mxu0
        %1068 = vmatprep.mubr.bf16.mxu0 %v802
        %1069 = vmatmul.mubr.bf16.gmra.mrb[0].mxu0 %v801
        %v1070 = vpop.f32.mrb[0].mxu0
        %v1071 = vadd.f32 %v906, %v1070
        %v1072 = vpop.f32.mrb[0].mxu0
        %v1073 = vpop.f32.mrb[0].mxu0
        %v1074 = vadd.f32 %v906, %v1073
        %v1075 = vpop.f32.mrb[0].mxu0
        %1076 = vmatprep.mubr.bf16.mxu0 %v806
        %1077 = vmatmul.mubr.bf16.gmra.mrb[0].mxu0 %v805
        %v1078 = vpop.f32.mrb[0].mxu0
        %v1079 = vadd.f32 %v906, %v1078
        %v1080 = vpop.f32.mrb[0].mxu0
        %v1081 = vpop.f32.mrb[0].mxu0
        %v1082 = vadd.f32 %v906, %v1081
        %v1083 = vpop.f32.mrb[0].mxu0
        %1084 = vmatprep.mubr.bf16.mxu0 %v810
        %1085 = vmatmul.mubr.bf16.gmra.mrb[0].mxu0 %v809
        %v1086 = vpop.f32.mrb[0].mxu0
        %v1087 = vadd.f32 %v906, %v1086
        %v1088 = vpop.f32.mrb[0].mxu0
        %v1089 = vpop.f32.mrb[0].mxu0
        %v1090 = vadd.f32 %v906, %v1089
        %v1091 = vpop.f32.mrb[0].mxu0
        %1092 = vmatprep.mubr.bf16.mxu0 %v814
        %1093 = vmatmul.mubr.bf16.gmra.mrb[0].mxu0 %v813
        %v1094 = vpop.f32.mrb[0].mxu0
        %v1095 = vadd.f32 %v906, %v1094
        %v1096 = vpop.f32.mrb[0].mxu0
        %v1097 = vpop.f32.mrb[0].mxu0
        %v1098 = vadd.f32 %v906, %v1097
        %v1099 = vpop.f32.mrb[0].mxu0
        %1100 = vmatprep.mubr.bf16.mxu0 %v818
        %1101 = vmatmul.mubr.bf16.gmra.mrb[0].mxu0 %v817
        %v1102 = vpop.f32.mrb[0].mxu0
        %v1103 = vadd.f32 %v906, %v1102
        %v1104 = vpop.f32.mrb[0].mxu0
        %v1105 = vpop.f32.mrb[0].mxu0
        %v1106 = vadd.f32 %v906, %v1105
        %v1107 = vpop.f32.mrb[0].mxu0
        %1108 = vmatprep.mubr.bf16.mxu0 %v822
        %1109 = vmatmul.mubr.bf16.gmra.mrb[0].mxu0 %v821
        %v1110 = vpop.f32.mrb[0].mxu0
        %v1111 = vadd.f32 %v906, %v1110
        %v1112 = vpop.f32.mrb[0].mxu0
        %v1113 = vpop.f32.mrb[0].mxu0
        %v1114 = vadd.f32 %v906, %v1113
        %v1115 = vpop.f32.mrb[0].mxu0
        %1116 = vmatprep.mubr.bf16.mxu0 %v826
        %1117 = vmatmul.mubr.bf16.gmra.mrb[0].mxu0 %v825
        %v1118 = vpop.f32.mrb[0].mxu0
        %v1119 = vadd.f32 %v906, %v1118
        %v1120 = vpop.f32.mrb[0].mxu0
        %v1121 = vpop.f32.mrb[0].mxu0
        %v1122 = vadd.f32 %v906, %v1121
        %v1123 = vpop.f32.mrb[0].mxu0
        %1124 = vmatprep.mubr.bf16.mxu0 %v830
        %1125 = vmatmul.mubr.bf16.gmra.mrb[0].mxu0 %v829
        %v1126 = vpop.f32.mrb[0].mxu0
        %v1127 = vadd.f32 %v906, %v1126
        %v1128 = vpop.f32.mrb[0].mxu0
        %v1129 = vpop.f32.mrb[0].mxu0
        %v1130 = vadd.f32 %v906, %v1129
        %v1131 = vpop.f32.mrb[0].mxu0
        %1132 = vmatprep.mubr.bf16.mxu0 %v834
        %1133 = vmatmul.mubr.bf16.gmra.mrb[0].mxu0 %v833
        %v1134 = vpop.f32.mrb[0].mxu0
        %v1135 = vadd.f32 %v906, %v1134
        %v1136 = vpop.f32.mrb[0].mxu0
        %v1137 = vpop.f32.mrb[0].mxu0
        %v1138 = vadd.f32 %v906, %v1137
        %v1139 = vpop.f32.mrb[0].mxu0
        %1140 = vmatprep.mubr.bf16.mxu0 %v838
        %1141 = vmatmul.mubr.bf16.gmra.mrb[0].mxu0 %v837
        %v1142 = vpop.f32.mrb[0].mxu0
        %v1143 = vadd.f32 %v906, %v1142
        %v1144 = vpop.f32.mrb[0].mxu0
        %v1145 = vpop.f32.mrb[0].mxu0
        %v1146 = vadd.f32 %v906, %v1145
        %v1147 = vpop.f32.mrb[0].mxu0
        %1148 = vmatprep.mubr.bf16.mxu0 %v842
        %1149 = vmatmul.mubr.bf16.gmra.mrb[0].mxu0 %v841
        %v1150 = vpop.f32.mrb[0].mxu0
        %v1151 = vadd.f32 %v906, %v1150
        %v1152 = vpop.f32.mrb[0].mxu0
        %v1153 = vpop.f32.mrb[0].mxu0
        %v1154 = vadd.f32 %v906, %v1153
        %v1155 = vpop.f32.mrb[0].mxu0
        %1156 = vmatprep.mubr.bf16.mxu0 %v846
        %1157 = vmatmul.mubr.bf16.gmra.mrb[0].mxu0 %v845
        %v1158 = vpop.f32.mrb[0].mxu0
        %v1159 = vadd.f32 %v906, %v1158
        %v1160 = vpop.f32.mrb[0].mxu0
        %v1161 = vpop.f32.mrb[0].mxu0
        %v1162 = vadd.f32 %v906, %v1161
        %v1163 = vpop.f32.mrb[0].mxu0
        %1164 = vmatprep.mubr.bf16.mxu0 %v850
        %1165 = vmatmul.mubr.bf16.gmra.mrb[0].mxu0 %v849
        %v1166 = vpop.f32.mrb[0].mxu0
        %v1167 = vadd.f32 %v906, %v1166
        %v1168 = vpop.f32.mrb[0].mxu0
        %v1169 = vpop.f32.mrb[0].mxu0
        %v1170 = vadd.f32 %v906, %v1169
        %v1171 = vpop.f32.mrb[0].mxu0
        %1172 = vmatprep.mubr.bf16.mxu0 %v854
        %1173 = vmatmul.mubr.bf16.gmra.mrb[0].mxu0 %v853
        %v1174 = vpop.f32.mrb[0].mxu0
        %v1175 = vadd.f32 %v906, %v1174
        %v1176 = vpop.f32.mrb[0].mxu0
        %v1177 = vpop.f32.mrb[0].mxu0
        %v1178 = vadd.f32 %v906, %v1177
        %v1179 = vpop.f32.mrb[0].mxu0
        %1180 = vmatprep.mubr.bf16.mxu0 %v858
        %1181 = vmatmul.mubr.bf16.gmra.mrb[0].mxu0 %v857
        %v1182 = vpop.f32.mrb[0].mxu0
        %v1183 = vadd.f32 %v906, %v1182
        %v1184 = vpop.f32.mrb[0].mxu0
        %v1185 = vpop.f32.mrb[0].mxu0
        %v1186 = vadd.f32 %v906, %v1185
        %v1187 = vpop.f32.mrb[0].mxu0
        %1188 = vmatprep.mubr.bf16.mxu0 %v862
        %1189 = vmatmul.mubr.bf16.gmra.mrb[0].mxu0 %v861
        %v1190 = vpop.f32.mrb[0].mxu0
        %v1191 = vadd.f32 %v906, %v1190
        %v1192 = vpop.f32.mrb[0].mxu0
        %v1193 = vpop.f32.mrb[0].mxu0
        %v1194 = vadd.f32 %v906, %v1193
        %v1195 = vpop.f32.mrb[0].mxu0
        %1196 = vdwg.mxu0
        %1197 = vmatprep.subr.bf16.mxu0 0
        %1198 = vmatpush1.bf16.msra.mxu0 %v884
        %1199 = vmatprep.subr.bf16.mxu0 0
        %1200 = vmatpush1.bf16.msra.mxu0 %v885
        %1201 = vmatprep.subr.bf16.mxu0 0
        %1202 = vmatpush1.bf16.msra.mxu0 %v886
        %1203 = vmatprep.subr.bf16.mxu0 0
        %1204 = vmatpush1.bf16.msra.mxu0 %v887
        %1205 = vmatprep.subr.bf16.mxu0 0
        %1206 = vmatpush1.bf16.msra.mxu0 %v888
        %1207 = vmatprep.subr.bf16.mxu0 0
        %1208 = vmatpush1.bf16.msra.mxu0 %v889
        %1209 = vmatprep.subr.bf16.mxu0 0
        %1210 = vmatpush1.bf16.msra.mxu0 %v890
        %1211 = vmatprep.subr.bf16.mxu0 0
        %1212 = vmatpush1.bf16.msra.mxu0 %v891
        %1213 = vmatprep.subr.bf16.mxu0 0
        %1214 = vmatpush1.bf16.msra.mxu0 %v892
        %1215 = vmatprep.subr.bf16.mxu0 0
        %1216 = vmatpush1.bf16.msra.mxu0 %v893
        %1217 = vmatprep.subr.bf16.mxu0 0
        %1218 = vmatpush1.bf16.msra.mxu0 %v894
        %1219 = vmatprep.subr.bf16.mxu0 0
        %1220 = vmatpush1.bf16.msra.mxu0 %v895
        %1221 = vmatprep.subr.bf16.mxu0 0
        %1222 = vmatpush1.bf16.msra.mxu0 %v896
        %1223 = vmatprep.subr.bf16.mxu0 0
        %1224 = vmatpush1.bf16.msra.mxu0 %v897
        %1225 = vmatprep.subr.bf16.mxu0 0
        %1226 = vmatpush1.bf16.msra.mxu0 %v898
        %1227 = vmatprep.subr.bf16.mxu0 0
        %1228 = vmatpush1.bf16.msra.mxu0 %v899
        %1229 = vmatprep.mubr.bf16.mxu0 %v740
        %1230 = vmatmul.mubr.bf16.gmra.mrb[0].mxu0 %v739
        %v1231 = vpop.f32.mrb[0].mxu0
        %v1232 = vadd.f32 %v943, %v1231
        %v1233 = vpop.f32.mrb[0].mxu0
        %v1234 = vpop.f32.mrb[0].mxu0
        %v1235 = vadd.f32 %v946, %v1234
        %v1236 = vpop.f32.mrb[0].mxu0
        %1237 = vmatprep.mubr.bf16.mxu0 %v744
        %1238 = vmatmul.mubr.bf16.gmra.mrb[0].mxu0 %v743
        %v1239 = vpop.f32.mrb[0].mxu0
        %v1240 = vadd.f32 %v951, %v1239
        %v1241 = vpop.f32.mrb[0].mxu0
        %v1242 = vpop.f32.mrb[0].mxu0
        %v1243 = vadd.f32 %v954, %v1242
        %v1244 = vpop.f32.mrb[0].mxu0
        %1245 = vmatprep.mubr.bf16.mxu0 %v748
        %1246 = vmatmul.mubr.bf16.gmra.mrb[0].mxu0 %v747
        %v1247 = vpop.f32.mrb[0].mxu0
        %v1248 = vadd.f32 %v959, %v1247
        %v1249 = vpop.f32.mrb[0].mxu0
        %v1250 = vpop.f32.mrb[0].mxu0
        %v1251 = vadd.f32 %v962, %v1250
        %v1252 = vpop.f32.mrb[0].mxu0
        %1253 = vmatprep.mubr.bf16.mxu0 %v752
        %1254 = vmatmul.mubr.bf16.gmra.mrb[0].mxu0 %v751
        %v1255 = vpop.f32.mrb[0].mxu0
        %v1256 = vadd.f32 %v967, %v1255
        %v1257 = vpop.f32.mrb[0].mxu0
        %v1258 = vpop.f32.mrb[0].mxu0
        %v1259 = vadd.f32 %v970, %v1258
        %v1260 = vpop.f32.mrb[0].mxu0
        %1261 = vmatprep.mubr.bf16.mxu0 %v756
        %1262 = vmatmul.mubr.bf16.gmra.mrb[0].mxu0 %v755
        %v1263 = vpop.f32.mrb[0].mxu0
        %v1264 = vadd.f32 %v975, %v1263
        %v1265 = vpop.f32.mrb[0].mxu0
        %v1266 = vpop.f32.mrb[0].mxu0
        %v1267 = vadd.f32 %v978, %v1266
        %v1268 = vpop.f32.mrb[0].mxu0
        %1269 = vmatprep.mubr.bf16.mxu0 %v760
        %1270 = vmatmul.mubr.bf16.gmra.mrb[0].mxu0 %v759
        %v1271 = vpop.f32.mrb[0].mxu0
        %v1272 = vadd.f32 %v983, %v1271
        %v1273 = vpop.f32.mrb[0].mxu0
        %v1274 = vpop.f32.mrb[0].mxu0
        %v1275 = vadd.f32 %v986, %v1274
        %v1276 = vpop.f32.mrb[0].mxu0
        %1277 = vmatprep.mubr.bf16.mxu0 %v764
        %1278 = vmatmul.mubr.bf16.gmra.mrb[0].mxu0 %v763
        %v1279 = vpop.f32.mrb[0].mxu0
        %v1280 = vadd.f32 %v991, %v1279
        %v1281 = vpop.f32.mrb[0].mxu0
        %v1282 = vpop.f32.mrb[0].mxu0
        %v1283 = vadd.f32 %v994, %v1282
        %v1284 = vpop.f32.mrb[0].mxu0
        %1285 = vmatprep.mubr.bf16.mxu0 %v768
        %1286 = vmatmul.mubr.bf16.gmra.mrb[0].mxu0 %v767
        %v1287 = vpop.f32.mrb[0].mxu0
        %v1288 = vadd.f32 %v999, %v1287
        %v1289 = vpop.f32.mrb[0].mxu0
        %v1290 = vpop.f32.mrb[0].mxu0
        %v1291 = vadd.f32 %v1002, %v1290
        %v1292 = vpop.f32.mrb[0].mxu0
        %1293 = vmatprep.mubr.bf16.mxu0 %v772
        %1294 = vmatmul.mubr.bf16.gmra.mrb[0].mxu0 %v771
        %v1295 = vpop.f32.mrb[0].mxu0
        %v1296 = vadd.f32 %v1007, %v1295
        %v1297 = vpop.f32.mrb[0].mxu0
        %v1298 = vpop.f32.mrb[0].mxu0
        %v1299 = vadd.f32 %v1010, %v1298
        %v1300 = vpop.f32.mrb[0].mxu0
        %1301 = vmatprep.mubr.bf16.mxu0 %v776
        %1302 = vmatmul.mubr.bf16.gmra.mrb[0].mxu0 %v775
        %v1303 = vpop.f32.mrb[0].mxu0
        %v1304 = vadd.f32 %v1015, %v1303
        %v1305 = vpop.f32.mrb[0].mxu0
        %v1306 = vpop.f32.mrb[0].mxu0
        %v1307 = vadd.f32 %v1018, %v1306
        %v1308 = vpop.f32.mrb[0].mxu0
        %1309 = vmatprep.mubr.bf16.mxu0 %v780
        %1310 = vmatmul.mubr.bf16.gmra.mrb[0].mxu0 %v779
        %v1311 = vpop.f32.mrb[0].mxu0
        %v1312 = vadd.f32 %v1023, %v1311
        %v1313 = vpop.f32.mrb[0].mxu0
        %v1314 = vpop.f32.mrb[0].mxu0
        %v1315 = vadd.f32 %v1026, %v1314
        %v1316 = vpop.f32.mrb[0].mxu0
        %1317 = vmatprep.mubr.bf16.mxu0 %v784
        %1318 = vmatmul.mubr.bf16.gmra.mrb[0].mxu0 %v783
        %v1319 = vpop.f32.mrb[0].mxu0
        %v1320 = vadd.f32 %v1031, %v1319
        %v1321 = vpop.f32.mrb[0].mxu0
        %v1322 = vpop.f32.mrb[0].mxu0
        %v1323 = vadd.f32 %v1034, %v1322
        %v1324 = vpop.f32.mrb[0].mxu0
        %1325 = vmatprep.mubr.bf16.mxu0 %v788
        %1326 = vmatmul.mubr.bf16.gmra.mrb[0].mxu0 %v787
        %v1327 = vpop.f32.mrb[0].mxu0
        %v1328 = vadd.f32 %v1039, %v1327
        %v1329 = vpop.f32.mrb[0].mxu0
        %v1330 = vpop.f32.mrb[0].mxu0
        %v1331 = vadd.f32 %v1042, %v1330
        %v1332 = vpop.f32.mrb[0].mxu0
        %1333 = vmatprep.mubr.bf16.mxu0 %v792
        %1334 = vmatmul.mubr.bf16.gmra.mrb[0].mxu0 %v791
        %v1335 = vpop.f32.mrb[0].mxu0
        %v1336 = vadd.f32 %v1047, %v1335
        %v1337 = vpop.f32.mrb[0].mxu0
        %v1338 = vpop.f32.mrb[0].mxu0
        %v1339 = vadd.f32 %v1050, %v1338
        %v1340 = vpop.f32.mrb[0].mxu0
        %1341 = vmatprep.mubr.bf16.mxu0 %v796
        %1342 = vmatmul.mubr.bf16.gmra.mrb[0].mxu0 %v795
        %v1343 = vpop.f32.mrb[0].mxu0
        %v1344 = vadd.f32 %v1055, %v1343
        %v1345 = vpop.f32.mrb[0].mxu0
        %v1346 = vpop.f32.mrb[0].mxu0
        %v1347 = vadd.f32 %v1058, %v1346
        %v1348 = vpop.f32.mrb[0].mxu0
        %1349 = vmatprep.mubr.bf16.mxu0 %v800
        %1350 = vmatmul.mubr.bf16.gmra.mrb[0].mxu0 %v799
        %v1351 = vpop.f32.mrb[0].mxu0
        %v1352 = vadd.f32 %v1063, %v1351
        %v1353 = vpop.f32.mrb[0].mxu0
        %v1354 = vpop.f32.mrb[0].mxu0
        %v1355 = vadd.f32 %v1066, %v1354
        %v1356 = vpop.f32.mrb[0].mxu0
        %1357 = vmatprep.mubr.bf16.mxu0 %v804
        %1358 = vmatmul.mubr.bf16.gmra.mrb[0].mxu0 %v803
        %v1359 = vpop.f32.mrb[0].mxu0
        %v1360 = vadd.f32 %v1071, %v1359
        %v1361 = vpop.f32.mrb[0].mxu0
        %v1362 = vpop.f32.mrb[0].mxu0
        %v1363 = vadd.f32 %v1074, %v1362
        %v1364 = vpop.f32.mrb[0].mxu0
        %1365 = vmatprep.mubr.bf16.mxu0 %v808
        %1366 = vmatmul.mubr.bf16.gmra.mrb[0].mxu0 %v807
        %v1367 = vpop.f32.mrb[0].mxu0
        %v1368 = vadd.f32 %v1079, %v1367
        %v1369 = vpop.f32.mrb[0].mxu0
        %v1370 = vpop.f32.mrb[0].mxu0
        %v1371 = vadd.f32 %v1082, %v1370
        %v1372 = vpop.f32.mrb[0].mxu0
        %1373 = vmatprep.mubr.bf16.mxu0 %v812
        %1374 = vmatmul.mubr.bf16.gmra.mrb[0].mxu0 %v811
        %v1375 = vpop.f32.mrb[0].mxu0
        %v1376 = vadd.f32 %v1087, %v1375
        %v1377 = vpop.f32.mrb[0].mxu0
        %v1378 = vpop.f32.mrb[0].mxu0
        %v1379 = vadd.f32 %v1090, %v1378
        %v1380 = vpop.f32.mrb[0].mxu0
        %1381 = vmatprep.mubr.bf16.mxu0 %v816
        %1382 = vmatmul.mubr.bf16.gmra.mrb[0].mxu0 %v815
        %v1383 = vpop.f32.mrb[0].mxu0
        %v1384 = vadd.f32 %v1095, %v1383
        %v1385 = vpop.f32.mrb[0].mxu0
        %v1386 = vpop.f32.mrb[0].mxu0
        %v1387 = vadd.f32 %v1098, %v1386
        %v1388 = vpop.f32.mrb[0].mxu0
        %1389 = vmatprep.mubr.bf16.mxu0 %v820
        %1390 = vmatmul.mubr.bf16.gmra.mrb[0].mxu0 %v819
        %v1391 = vpop.f32.mrb[0].mxu0
        %v1392 = vadd.f32 %v1103, %v1391
        %v1393 = vpop.f32.mrb[0].mxu0
        %v1394 = vpop.f32.mrb[0].mxu0
        %v1395 = vadd.f32 %v1106, %v1394
        %v1396 = vpop.f32.mrb[0].mxu0
        %1397 = vmatprep.mubr.bf16.mxu0 %v824
        %1398 = vmatmul.mubr.bf16.gmra.mrb[0].mxu0 %v823
        %v1399 = vpop.f32.mrb[0].mxu0
        %v1400 = vadd.f32 %v1111, %v1399
        %v1401 = vpop.f32.mrb[0].mxu0
        %v1402 = vpop.f32.mrb[0].mxu0
        %v1403 = vadd.f32 %v1114, %v1402
        %v1404 = vpop.f32.mrb[0].mxu0
        %1405 = vmatprep.mubr.bf16.mxu0 %v828
        %1406 = vmatmul.mubr.bf16.gmra.mrb[0].mxu0 %v827
        %v1407 = vpop.f32.mrb[0].mxu0
        %v1408 = vadd.f32 %v1119, %v1407
        %v1409 = vpop.f32.mrb[0].mxu0
        %v1410 = vpop.f32.mrb[0].mxu0
        %v1411 = vadd.f32 %v1122, %v1410
        %v1412 = vpop.f32.mrb[0].mxu0
        %1413 = vmatprep.mubr.bf16.mxu0 %v832
        %1414 = vmatmul.mubr.bf16.gmra.mrb[0].mxu0 %v831
        %v1415 = vpop.f32.mrb[0].mxu0
        %v1416 = vadd.f32 %v1127, %v1415
        %v1417 = vpop.f32.mrb[0].mxu0
        %v1418 = vpop.f32.mrb[0].mxu0
        %v1419 = vadd.f32 %v1130, %v1418
        %v1420 = vpop.f32.mrb[0].mxu0
        %1421 = vmatprep.mubr.bf16.mxu0 %v836
        %1422 = vmatmul.mubr.bf16.gmra.mrb[0].mxu0 %v835
        %v1423 = vpop.f32.mrb[0].mxu0
        %v1424 = vadd.f32 %v1135, %v1423
        %v1425 = vpop.f32.mrb[0].mxu0
        %v1426 = vpop.f32.mrb[0].mxu0
        %v1427 = vadd.f32 %v1138, %v1426
        %v1428 = vpop.f32.mrb[0].mxu0
        %1429 = vmatprep.mubr.bf16.mxu0 %v840
        %1430 = vmatmul.mubr.bf16.gmra.mrb[0].mxu0 %v839
        %v1431 = vpop.f32.mrb[0].mxu0
        %v1432 = vadd.f32 %v1143, %v1431
        %v1433 = vpop.f32.mrb[0].mxu0
        %v1434 = vpop.f32.mrb[0].mxu0
        %v1435 = vadd.f32 %v1146, %v1434
        %v1436 = vpop.f32.mrb[0].mxu0
        %1437 = vmatprep.mubr.bf16.mxu0 %v844
        %1438 = vmatmul.mubr.bf16.gmra.mrb[0].mxu0 %v843
        %v1439 = vpop.f32.mrb[0].mxu0
        %v1440 = vadd.f32 %v1151, %v1439
        %v1441 = vpop.f32.mrb[0].mxu0
        %v1442 = vpop.f32.mrb[0].mxu0
        %v1443 = vadd.f32 %v1154, %v1442
        %v1444 = vpop.f32.mrb[0].mxu0
        %1445 = vmatprep.mubr.bf16.mxu0 %v848
        %1446 = vmatmul.mubr.bf16.gmra.mrb[0].mxu0 %v847
        %v1447 = vpop.f32.mrb[0].mxu0
        %v1448 = vadd.f32 %v1159, %v1447
        %v1449 = vpop.f32.mrb[0].mxu0
        %v1450 = vpop.f32.mrb[0].mxu0
        %v1451 = vadd.f32 %v1162, %v1450
        %v1452 = vpop.f32.mrb[0].mxu0
        %1453 = vmatprep.mubr.bf16.mxu0 %v852
        %1454 = vmatmul.mubr.bf16.gmra.mrb[0].mxu0 %v851
        %v1455 = vpop.f32.mrb[0].mxu0
        %v1456 = vadd.f32 %v1167, %v1455
        %v1457 = vpop.f32.mrb[0].mxu0
        %v1458 = vpop.f32.mrb[0].mxu0
        %v1459 = vadd.f32 %v1170, %v1458
        %v1460 = vpop.f32.mrb[0].mxu0
        %1461 = vmatprep.mubr.bf16.mxu0 %v856
        %1462 = vmatmul.mubr.bf16.gmra.mrb[0].mxu0 %v855
        %v1463 = vpop.f32.mrb[0].mxu0
        %v1464 = vadd.f32 %v1175, %v1463
        %v1465 = vpop.f32.mrb[0].mxu0
        %v1466 = vpop.f32.mrb[0].mxu0
        %v1467 = vadd.f32 %v1178, %v1466
        %v1468 = vpop.f32.mrb[0].mxu0
        %1469 = vmatprep.mubr.bf16.mxu0 %v860
        %1470 = vmatmul.mubr.bf16.gmra.mrb[0].mxu0 %v859
        %v1471 = vpop.f32.mrb[0].mxu0
        %v1472 = vadd.f32 %v1183, %v1471
        %v1473 = vpop.f32.mrb[0].mxu0
        %v1474 = vpop.f32.mrb[0].mxu0
        %v1475 = vadd.f32 %v1186, %v1474
        %v1476 = vpop.f32.mrb[0].mxu0
        %1477 = vmatprep.mubr.bf16.mxu0 %v864
        %1478 = vmatmul.mubr.bf16.gmra.mrb[0].mxu0 %v863
        %v1479 = vpop.f32.mrb[0].mxu0
        %v1480 = vadd.f32 %v1191, %v1479
        %v1481 = vpop.f32.mrb[0].mxu0
        %v1482 = vpop.f32.mrb[0].mxu0
        %v1483 = vadd.f32 %v1194, %v1482
        %v1484 = vpop.f32.mrb[0].mxu0
        %1485 = vdwg.mxu0
        %p1486 = scmp.lt.s32.totalorder %s23, 2
        // Predicated region
        $region50: #{tpu_custom_call.1} parent=27 // pred_check
          %p1487 = pneg %p1486
        $region51: #{tpu_custom_call.1} parent=27 // pred_check_branch
          %1489 = sbr.rel (%p1487) target = $region53
        $region52: #{tpu_custom_call.1} parent=27 // pred_region
          %v1490 = vmax.f32 %v1232, 0.0
          %v1491 = vmax.f32 %v1235, 0.0
          %v1492 = vmax.f32 %v1240, 0.0
          %v1493 = vmax.f32 %v1243, 0.0
          %v1494 = vmax.f32 %v1248, 0.0
          %v1495 = vmax.f32 %v1251, 0.0
          %v1496 = vmax.f32 %v1256, 0.0
          %v1497 = vmax.f32 %v1259, 0.0
          %v1498 = vmax.f32 %v1264, 0.0
          %v1499 = vmax.f32 %v1267, 0.0
          %v1500 = vmax.f32 %v1272, 0.0
          %v1501 = vmax.f32 %v1275, 0.0
          %v1502 = vmax.f32 %v1280, 0.0
          %v1503 = vmax.f32 %v1283, 0.0
          %v1504 = vmax.f32 %v1288, 0.0
          %v1505 = vmax.f32 %v1291, 0.0
          %v1506 = vmax.f32 %v1296, 0.0
          %v1507 = vmax.f32 %v1299, 0.0
          %v1508 = vmax.f32 %v1304, 0.0
          %v1509 = vmax.f32 %v1307, 0.0
          %v1510 = vmax.f32 %v1312, 0.0
          %v1511 = vmax.f32 %v1315, 0.0
          %v1512 = vmax.f32 %v1320, 0.0
          %v1513 = vmax.f32 %v1323, 0.0
          %v1514 = vmax.f32 %v1328, 0.0
          %v1515 = vmax.f32 %v1331, 0.0
          %v1516 = vmax.f32 %v1336, 0.0
          %v1517 = vmax.f32 %v1339, 0.0
          %v1518 = vmax.f32 %v1344, 0.0
          %v1519 = vmax.f32 %v1347, 0.0
          %v1520 = vmax.f32 %v1352, 0.0
          %v1521 = vmax.f32 %v1355, 0.0
          %v1522 = vmax.f32 %v1360, 0.0
          %v1523 = vmax.f32 %v1363, 0.0
          %v1524 = vmax.f32 %v1368, 0.0
          %v1525 = vmax.f32 %v1371, 0.0
          %v1526 = vmax.f32 %v1376, 0.0
          %v1527 = vmax.f32 %v1379, 0.0
          %v1528 = vmax.f32 %v1384, 0.0
          %v1529 = vmax.f32 %v1387, 0.0
          %v1530 = vmax.f32 %v1392, 0.0
          %v1531 = vmax.f32 %v1395, 0.0
          %v1532 = vmax.f32 %v1400, 0.0
          %v1533 = vmax.f32 %v1403, 0.0
          %v1534 = vmax.f32 %v1408, 0.0
          %v1535 = vmax.f32 %v1411, 0.0
          %v1536 = vmax.f32 %v1416, 0.0
          %v1537 = vmax.f32 %v1419, 0.0
          %v1538 = vmax.f32 %v1424, 0.0
          %v1539 = vmax.f32 %v1427, 0.0
          %v1540 = vmax.f32 %v1432, 0.0
          %v1541 = vmax.f32 %v1435, 0.0
          %v1542 = vmax.f32 %v1440, 0.0
          %v1543 = vmax.f32 %v1443, 0.0
          %v1544 = vmax.f32 %v1448, 0.0
          %v1545 = vmax.f32 %v1451, 0.0
          %v1546 = vmax.f32 %v1456, 0.0
          %v1547 = vmax.f32 %v1459, 0.0
          %v1548 = vmax.f32 %v1464, 0.0
          %v1549 = vmax.f32 %v1467, 0.0
          %v1550 = vmax.f32 %v1472, 0.0
          %v1551 = vmax.f32 %v1475, 0.0
          %v1552 = vmax.f32 %v1480, 0.0
          %v1553 = vmax.f32 %v1483, 0.0
          %v1554 = vpack.c.bf16 %v1491, %v1490
          %v1555 = vpack.c.bf16 %v1493, %v1492
          %v1556 = vpack.c.bf16 %v1495, %v1494
          %v1557 = vpack.c.bf16 %v1497, %v1496
          %v1558 = vpack.c.bf16 %v1499, %v1498
          %v1559 = vpack.c.bf16 %v1501, %v1500
          %v1560 = vpack.c.bf16 %v1503, %v1502
          %v1561 = vpack.c.bf16 %v1505, %v1504
          %v1562 = vpack.c.bf16 %v1507, %v1506
          %v1563 = vpack.c.bf16 %v1509, %v1508
          %v1564 = vpack.c.bf16 %v1511, %v1510
          %v1565 = vpack.c.bf16 %v1513, %v1512
          %v1566 = vpack.c.bf16 %v1515, %v1514
          %v1567 = vpack.c.bf16 %v1517, %v1516
          %v1568 = vpack.c.bf16 %v1519, %v1518
          %v1569 = vpack.c.bf16 %v1521, %v1520
          %v1570 = vpack.c.bf16 %v1523, %v1522
          %v1571 = vpack.c.bf16 %v1525, %v1524
          %v1572 = vpack.c.bf16 %v1527, %v1526
          %v1573 = vpack.c.bf16 %v1529, %v1528
          %v1574 = vpack.c.bf16 %v1531, %v1530
          %v1575 = vpack.c.bf16 %v1533, %v1532
          %v1576 = vpack.c.bf16 %v1535, %v1534
          %v1577 = vpack.c.bf16 %v1537, %v1536
          %v1578 = vpack.c.bf16 %v1539, %v1538
          %v1579 = vpack.c.bf16 %v1541, %v1540
          %v1580 = vpack.c.bf16 %v1543, %v1542
          %v1581 = vpack.c.bf16 %v1545, %v1544
          %v1582 = vpack.c.bf16 %v1547, %v1546
          %v1583 = vpack.c.bf16 %v1549, %v1548
          %v1584 = vpack.c.bf16 %v1551, %v1550
          %v1585 = vpack.c.bf16 %v1553, %v1552
          %s1586 = sadd.s32 %s23, 1
          %s1587 = smul.u32 %s1586, 16
          %s1588 = smul.addr %s1587, 4
          %s1589 = scalar_lea.vmem [#allocation5], %s1588
          %v1590 = vld [vmem:[%s1589] sm:$0xf]
          %v1591 = vld [vmem:[%s1589 + $0x4] sm:$0xf]
          %v1592 = vld [vmem:[%s1589 + $0x8] sm:$0xf]
          %v1593 = vld [vmem:[%s1589 + $0xc] sm:$0xf]
          %v1594 = vld [vmem:[%s1589 + $0x10] sm:$0xf]
          %v1595 = vld [vmem:[%s1589 + $0x14] sm:$0xf]
          %v1596 = vld [vmem:[%s1589 + $0x18] sm:$0xf]
          %v1597 = vld [vmem:[%s1589 + $0x1c] sm:$0xf]
          %v1598 = vld [vmem:[%s1589 + $0x20] sm:$0xf]
          %v1599 = vld [vmem:[%s1589 + $0x24] sm:$0xf]
          %v1600 = vld [vmem:[%s1589 + $0x28] sm:$0xf]
          %v1601 = vld [vmem:[%s1589 + $0x2c] sm:$0xf]
          %v1602 = vld [vmem:[%s1589 + $0x30] sm:$0xf]
          %v1603 = vld [vmem:[%s1589 + $0x34] sm:$0xf]
          %v1604 = vld [vmem:[%s1589 + $0x38] sm:$0xf]
          %v1605 = vld [vmem:[%s1589 + $0x3c] sm:$0xf]
          %v1622 = vunpack.c.l.b16 %v1590
          %v1623 = vunpack.c.l.b16 %v1591
          %v1624 = vunpack.c.l.b16 %v1592
          %v1625 = vunpack.c.l.b16 %v1593
          %v1626 = vunpack.c.l.b16 %v1594
          %v1627 = vunpack.c.l.b16 %v1595
          %v1628 = vunpack.c.l.b16 %v1596
          %v1629 = vunpack.c.l.b16 %v1597
          %v1630 = vunpack.c.l.b16 %v1598
          %v1631 = vunpack.c.l.b16 %v1599
          %v1632 = vunpack.c.l.b16 %v1600
          %v1633 = vunpack.c.l.b16 %v1601
          %v1634 = vunpack.c.l.b16 %v1602
          %v1635 = vunpack.c.l.b16 %v1603
          %v1636 = vunpack.c.l.b16 %v1604
          %v1637 = vunpack.c.l.b16 %v1605
          %v1638 = vpack.c.b16 %v1623, %v1622
          %v1639 = vpack.c.b16 %v1625, %v1624
          %v1640 = vpack.c.b16 %v1627, %v1626
          %v1641 = vpack.c.b16 %v1629, %v1628
          %v1642 = vpack.c.b16 %v1631, %v1630
          %v1643 = vpack.c.b16 %v1633, %v1632
          %v1644 = vpack.c.b16 %v1635, %v1634
          %v1645 = vpack.c.b16 %v1637, %v1636
          %1654 = vmatprep.subr.bf16.mxu0 0
          %1655 = vmatpush1.bf16.msra.mxu0 %v1638
          %1656 = vmatprep.subr.bf16.mxu0 0
          %1657 = vmatpush1.bf16.msra.mxu0 %v1639
          %1658 = vmatprep.subr.bf16.mxu0 0
          %1659 = vmatpush1.bf16.msra.mxu0 %v1640
          %1660 = vmatprep.subr.bf16.mxu0 0
          %1661 = vmatpush1.bf16.msra.mxu0 %v1641
          %1662 = vmatprep.subr.bf16.mxu0 0
          %1663 = vmatpush1.bf16.msra.mxu0 %v1642
          %1664 = vmatprep.subr.bf16.mxu0 0
          %1665 = vmatpush1.bf16.msra.mxu0 %v1643
          %1666 = vmatprep.subr.bf16.mxu0 0
          %1667 = vmatpush1.bf16.msra.mxu0 %v1644
          %1668 = vmatprep.subr.bf16.mxu0 0
          %1669 = vmatpush1.bf16.msra.mxu0 %v1645
          %1670 = vmatprep.subr.bf16.mxu0 0
          %1671 = vmatpush1.bf16.msra.mxu0 0
          %1672 = vmatprep.subr.bf16.mxu0 0
          %1673 = vmatpush1.bf16.msra.mxu0 0
          %1674 = vmatprep.subr.bf16.mxu0 0
          %1675 = vmatpush1.bf16.msra.mxu0 0
          %1676 = vmatprep.subr.bf16.mxu0 0
          %1677 = vmatpush1.bf16.msra.mxu0 0
          %1678 = vmatprep.subr.bf16.mxu0 0
          %1679 = vmatpush1.bf16.msra.mxu0 0
          %1680 = vmatprep.subr.bf16.mxu0 0
          %1681 = vmatpush1.bf16.msra.mxu0 0
          %1682 = vmatprep.subr.bf16.mxu0 0
          %1683 = vmatpush1.bf16.msra.mxu0 0
          %1684 = vmatprep.subr.bf16.mxu0 0
          %1685 = vmatpush1.bf16.msra.mxu0 0
          %1686 = vmatprep.mubr.bf16.mxu0 0
          %1687 = vmatmul.mubr.bf16.gmra.mrb[0].mxu0 %v1554
          %v1688 = vpop.f32.mrb[0].mxu0
          %v1689 = vadd.f32 0.0, %v1688
          %v1690 = vpop.f32.mrb[0].mxu0
          %v1691 = vpop.f32.mrb[0].mxu0
          %v1692 = vadd.f32 0.0, %v1691
          %v1693 = vpop.f32.mrb[0].mxu0
          %1694 = vmatprep.mubr.bf16.mxu0 0
          %1695 = vmatmul.mubr.bf16.gmra.mrb[0].mxu0 %v1555
          %v1696 = vpop.f32.mrb[0].mxu0
          %v1697 = vadd.f32 0.0, %v1696
          %v1698 = vpop.f32.mrb[0].mxu0
          %v1699 = vpop.f32.mrb[0].mxu0
          %v1700 = vadd.f32 0.0, %v1699
          %v1701 = vpop.f32.mrb[0].mxu0
          %1702 = vmatprep.mubr.bf16.mxu0 0
          %1703 = vmatmul.mubr.bf16.gmra.mrb[0].mxu0 %v1556
          %v1704 = vpop.f32.mrb[0].mxu0
          %v1705 = vadd.f32 0.0, %v1704
          %v1706 = vpop.f32.mrb[0].mxu0
          %v1707 = vpop.f32.mrb[0].mxu0
          %v1708 = vadd.f32 0.0, %v1707
          %v1709 = vpop.f32.mrb[0].mxu0
          %1710 = vmatprep.mubr.bf16.mxu0 0
          %1711 = vmatmul.mubr.bf16.gmra.mrb[0].mxu0 %v1557
          %v1712 = vpop.f32.mrb[0].mxu0
          %v1713 = vadd.f32 0.0, %v1712
          %v1714 = vpop.f32.mrb[0].mxu0
          %v1715 = vpop.f32.mrb[0].mxu0
          %v1716 = vadd.f32 0.0, %v1715
          %v1717 = vpop.f32.mrb[0].mxu0
          %1718 = vmatprep.mubr.bf16.mxu0 0
          %1719 = vmatmul.mubr.bf16.gmra.mrb[0].mxu0 %v1558
          %v1720 = vpop.f32.mrb[0].mxu0
          %v1721 = vadd.f32 0.0, %v1720
          %v1722 = vpop.f32.mrb[0].mxu0
          %v1723 = vpop.f32.mrb[0].mxu0
          %v1724 = vadd.f32 0.0, %v1723
          %v1725 = vpop.f32.mrb[0].mxu0
          %1726 = vmatprep.mubr.bf16.mxu0 0
          %1727 = vmatmul.mubr.bf16.gmra.mrb[0].mxu0 %v1559
          %v1728 = vpop.f32.mrb[0].mxu0
          %v1729 = vadd.f32 0.0, %v1728
          %v1730 = vpop.f32.mrb[0].mxu0
          %v1731 = vpop.f32.mrb[0].mxu0
          %v1732 = vadd.f32 0.0, %v1731
          %v1733 = vpop.f32.mrb[0].mxu0
          %1734 = vmatprep.mubr.bf16.mxu0 0
          %1735 = vmatmul.mubr.bf16.gmra.mrb[0].mxu0 %v1560
          %v1736 = vpop.f32.mrb[0].mxu0
          %v1737 = vadd.f32 0.0, %v1736
          %v1738 = vpop.f32.mrb[0].mxu0
          %v1739 = vpop.f32.mrb[0].mxu0
          %v1740 = vadd.f32 0.0, %v1739
          %v1741 = vpop.f32.mrb[0].mxu0
          %1742 = vmatprep.mubr.bf16.mxu0 0
          %1743 = vmatmul.mubr.bf16.gmra.mrb[0].mxu0 %v1561
          %v1744 = vpop.f32.mrb[0].mxu0
          %v1745 = vadd.f32 0.0, %v1744
          %v1746 = vpop.f32.mrb[0].mxu0
          %v1747 = vpop.f32.mrb[0].mxu0
          %v1748 = vadd.f32 0.0, %v1747
          %v1749 = vpop.f32.mrb[0].mxu0
          %1750 = vmatprep.mubr.bf16.mxu0 0
          %1751 = vmatmul.mubr.bf16.gmra.mrb[0].mxu0 %v1562
          %v1752 = vpop.f32.mrb[0].mxu0
          %v1753 = vadd.f32 0.0, %v1752
          %v1754 = vpop.f32.mrb[0].mxu0
          %v1755 = vpop.f32.mrb[0].mxu0
          %v1756 = vadd.f32 0.0, %v1755
          %v1757 = vpop.f32.mrb[0].mxu0
          %1758 = vmatprep.mubr.bf16.mxu0 0
          %1759 = vmatmul.mubr.bf16.gmra.mrb[0].mxu0 %v1563
          %v1760 = vpop.f32.mrb[0].mxu0
          %v1761 = vadd.f32 0.0, %v1760
          %v1762 = vpop.f32.mrb[0].mxu0
          %v1763 = vpop.f32.mrb[0].mxu0
          %v1764 = vadd.f32 0.0, %v1763
          %v1765 = vpop.f32.mrb[0].mxu0
          %1766 = vmatprep.mubr.bf16.mxu0 0
          %1767 = vmatmul.mubr.bf16.gmra.mrb[0].mxu0 %v1564
          %v1768 = vpop.f32.mrb[0].mxu0
          %v1769 = vadd.f32 0.0, %v1768
          %v1770 = vpop.f32.mrb[0].mxu0
          %v1771 = vpop.f32.mrb[0].mxu0
          %v1772 = vadd.f32 0.0, %v1771
          %v1773 = vpop.f32.mrb[0].mxu0
          %1774 = vmatprep.mubr.bf16.mxu0 0
          %1775 = vmatmul.mubr.bf16.gmra.mrb[0].mxu0 %v1565
          %v1776 = vpop.f32.mrb[0].mxu0
          %v1777 = vadd.f32 0.0, %v1776
          %v1778 = vpop.f32.mrb[0].mxu0
          %v1779 = vpop.f32.mrb[0].mxu0
          %v1780 = vadd.f32 0.0, %v1779
          %v1781 = vpop.f32.mrb[0].mxu0
          %1782 = vmatprep.mubr.bf16.mxu0 0
          %1783 = vmatmul.mubr.bf16.gmra.mrb[0].mxu0 %v1566
          %v1784 = vpop.f32.mrb[0].mxu0
          %v1785 = vadd.f32 0.0, %v1784
          %v1786 = vpop.f32.mrb[0].mxu0
          %v1787 = vpop.f32.mrb[0].mxu0
          %v1788 = vadd.f32 0.0, %v1787
          %v1789 = vpop.f32.mrb[0].mxu0
          %1790 = vmatprep.mubr.bf16.mxu0 0
          %1791 = vmatmul.mubr.bf16.gmra.mrb[0].mxu0 %v1567
          %v1792 = vpop.f32.mrb[0].mxu0
          %v1793 = vadd.f32 0.0, %v1792
          %v1794 = vpop.f32.mrb[0].mxu0
          %v1795 = vpop.f32.mrb[0].mxu0
          %v1796 = vadd.f32 0.0, %v1795
          %v1797 = vpop.f32.mrb[0].mxu0
          %1798 = vmatprep.mubr.bf16.mxu0 0
          %1799 = vmatmul.mubr.bf16.gmra.mrb[0].mxu0 %v1568
          %v1800 = vpop.f32.mrb[0].mxu0
          %v1801 = vadd.f32 0.0, %v1800
          %v1802 = vpop.f32.mrb[0].mxu0
          %v1803 = vpop.f32.mrb[0].mxu0
          %v1804 = vadd.f32 0.0, %v1803
          %v1805 = vpop.f32.mrb[0].mxu0
          %1806 = vmatprep.mubr.bf16.mxu0 0
          %1807 = vmatmul.mubr.bf16.gmra.mrb[0].mxu0 %v1569
          %v1808 = vpop.f32.mrb[0].mxu0
          %v1809 = vadd.f32 0.0, %v1808
          %v1810 = vpop.f32.mrb[0].mxu0
          %v1811 = vpop.f32.mrb[0].mxu0
          %v1812 = vadd.f32 0.0, %v1811
          %v1813 = vpop.f32.mrb[0].mxu0
          %1814 = vmatprep.mubr.bf16.mxu0 0
          %1815 = vmatmul.mubr.bf16.gmra.mrb[0].mxu0 %v1570
          %v1816 = vpop.f32.mrb[0].mxu0
          %v1817 = vadd.f32 0.0, %v1816
          %v1818 = vpop.f32.mrb[0].mxu0
          %v1819 = vpop.f32.mrb[0].mxu0
          %v1820 = vadd.f32 0.0, %v1819
          %v1821 = vpop.f32.mrb[0].mxu0
          %1822 = vmatprep.mubr.bf16.mxu0 0
          %1823 = vmatmul.mubr.bf16.gmra.mrb[0].mxu0 %v1571
          %v1824 = vpop.f32.mrb[0].mxu0
          %v1825 = vadd.f32 0.0, %v1824
          %v1826 = vpop.f32.mrb[0].mxu0
          %v1827 = vpop.f32.mrb[0].mxu0
          %v1828 = vadd.f32 0.0, %v1827
          %v1829 = vpop.f32.mrb[0].mxu0
          %1830 = vmatprep.mubr.bf16.mxu0 0
          %1831 = vmatmul.mubr.bf16.gmra.mrb[0].mxu0 %v1572
          %v1832 = vpop.f32.mrb[0].mxu0
          %v1833 = vadd.f32 0.0, %v1832
          %v1834 = vpop.f32.mrb[0].mxu0
          %v1835 = vpop.f32.mrb[0].mxu0
          %v1836 = vadd.f32 0.0, %v1835
          %v1837 = vpop.f32.mrb[0].mxu0
          %1838 = vmatprep.mubr.bf16.mxu0 0
          %1839 = vmatmul.mubr.bf16.gmra.mrb[0].mxu0 %v1573
          %v1840 = vpop.f32.mrb[0].mxu0
          %v1841 = vadd.f32 0.0, %v1840
          %v1842 = vpop.f32.mrb[0].mxu0
          %v1843 = vpop.f32.mrb[0].mxu0
          %v1844 = vadd.f32 0.0, %v1843
          %v1845 = vpop.f32.mrb[0].mxu0
          %1846 = vmatprep.mubr.bf16.mxu0 0
          %1847 = vmatmul.mubr.bf16.gmra.mrb[0].mxu0 %v1574
          %v1848 = vpop.f32.mrb[0].mxu0
          %v1849 = vadd.f32 0.0, %v1848
          %v1850 = vpop.f32.mrb[0].mxu0
          %v1851 = vpop.f32.mrb[0].mxu0
          %v1852 = vadd.f32 0.0, %v1851
          %v1853 = vpop.f32.mrb[0].mxu0
          %1854 = vmatprep.mubr.bf16.mxu0 0
          %1855 = vmatmul.mubr.bf16.gmra.mrb[0].mxu0 %v1575
          %v1856 = vpop.f32.mrb[0].mxu0
          %v1857 = vadd.f32 0.0, %v1856
          %v1858 = vpop.f32.mrb[0].mxu0
          %v1859 = vpop.f32.mrb[0].mxu0
          %v1860 = vadd.f32 0.0, %v1859
          %v1861 = vpop.f32.mrb[0].mxu0
          %1862 = vmatprep.mubr.bf16.mxu0 0
          %1863 = vmatmul.mubr.bf16.gmra.mrb[0].mxu0 %v1576
          %v1864 = vpop.f32.mrb[0].mxu0
          %v1865 = vadd.f32 0.0, %v1864
          %v1866 = vpop.f32.mrb[0].mxu0
          %v1867 = vpop.f32.mrb[0].mxu0
          %v1868 = vadd.f32 0.0, %v1867
          %v1869 = vpop.f32.mrb[0].mxu0
          %1870 = vmatprep.mubr.bf16.mxu0 0
          %1871 = vmatmul.mubr.bf16.gmra.mrb[0].mxu0 %v1577
          %v1872 = vpop.f32.mrb[0].mxu0
          %v1873 = vadd.f32 0.0, %v1872
          %v1874 = vpop.f32.mrb[0].mxu0
          %v1875 = vpop.f32.mrb[0].mxu0
          %v1876 = vadd.f32 0.0, %v1875
          %v1877 = vpop.f32.mrb[0].mxu0
          %1878 = vmatprep.mubr.bf16.mxu0 0
          %1879 = vmatmul.mubr.bf16.gmra.mrb[0].mxu0 %v1578
          %v1880 = vpop.f32.mrb[0].mxu0
          %v1881 = vadd.f32 0.0, %v1880
          %v1882 = vpop.f32.mrb[0].mxu0
          %v1883 = vpop.f32.mrb[0].mxu0
          %v1884 = vadd.f32 0.0, %v1883
          %v1885 = vpop.f32.mrb[0].mxu0
          %1886 = vmatprep.mubr.bf16.mxu0 0
          %1887 = vmatmul.mubr.bf16.gmra.mrb[0].mxu0 %v1579
          %v1888 = vpop.f32.mrb[0].mxu0
          %v1889 = vadd.f32 0.0, %v1888
          %v1890 = vpop.f32.mrb[0].mxu0
          %v1891 = vpop.f32.mrb[0].mxu0
          %v1892 = vadd.f32 0.0, %v1891
          %v1893 = vpop.f32.mrb[0].mxu0
          %1894 = vmatprep.mubr.bf16.mxu0 0
          %1895 = vmatmul.mubr.bf16.gmra.mrb[0].mxu0 %v1580
          %v1896 = vpop.f32.mrb[0].mxu0
          %v1897 = vadd.f32 0.0, %v1896
          %v1898 = vpop.f32.mrb[0].mxu0
          %v1899 = vpop.f32.mrb[0].mxu0
          %v1900 = vadd.f32 0.0, %v1899
          %v1901 = vpop.f32.mrb[0].mxu0
          %1902 = vmatprep.mubr.bf16.mxu0 0
          %1903 = vmatmul.mubr.bf16.gmra.mrb[0].mxu0 %v1581
          %v1904 = vpop.f32.mrb[0].mxu0
          %v1905 = vadd.f32 0.0, %v1904
          %v1906 = vpop.f32.mrb[0].mxu0
          %v1907 = vpop.f32.mrb[0].mxu0
          %v1908 = vadd.f32 0.0, %v1907
          %v1909 = vpop.f32.mrb[0].mxu0
          %1910 = vmatprep.mubr.bf16.mxu0 0
          %1911 = vmatmul.mubr.bf16.gmra.mrb[0].mxu0 %v1582
          %v1912 = vpop.f32.mrb[0].mxu0
          %v1913 = vadd.f32 0.0, %v1912
          %v1914 = vpop.f32.mrb[0].mxu0
          %v1915 = vpop.f32.mrb[0].mxu0
          %v1916 = vadd.f32 0.0, %v1915
          %v1917 = vpop.f32.mrb[0].mxu0
          %1918 = vmatprep.mubr.bf16.mxu0 0
          %1919 = vmatmul.mubr.bf16.gmra.mrb[0].mxu0 %v1583
          %v1920 = vpop.f32.mrb[0].mxu0
          %v1921 = vadd.f32 0.0, %v1920
          %v1922 = vpop.f32.mrb[0].mxu0
          %v1923 = vpop.f32.mrb[0].mxu0
          %v1924 = vadd.f32 0.0, %v1923
          %v1925 = vpop.f32.mrb[0].mxu0
          %1926 = vmatprep.mubr.bf16.mxu0 0
          %1927 = vmatmul.mubr.bf16.gmra.mrb[0].mxu0 %v1584
          %v1928 = vpop.f32.mrb[0].mxu0
          %v1929 = vadd.f32 0.0, %v1928
          %v1930 = vpop.f32.mrb[0].mxu0
          %v1931 = vpop.f32.mrb[0].mxu0
          %v1932 = vadd.f32 0.0, %v1931
          %v1933 = vpop.f32.mrb[0].mxu0
          %1934 = vmatprep.mubr.bf16.mxu0 0
          %1935 = vmatmul.mubr.bf16.gmra.mrb[0].mxu0 %v1585
          %v1936 = vpop.f32.mrb[0].mxu0
          %v1937 = vadd.f32 0.0, %v1936
          %v1938 = vpop.f32.mrb[0].mxu0
          %v1939 = vpop.f32.mrb[0].mxu0
          %v1940 = vadd.f32 0.0, %v1939
          %v1941 = vpop.f32.mrb[0].mxu0
          %1942 = vdwg.mxu0
          %v1943 = vpack.c.bf16 %v1692, %v1689
          %v1944 = vpack.c.bf16 %v1700, %v1697
          %v1945 = vpack.c.bf16 %v1708, %v1705
          %v1946 = vpack.c.bf16 %v1716, %v1713
          %v1947 = vpack.c.bf16 %v1724, %v1721
          %v1948 = vpack.c.bf16 %v1732, %v1729
          %v1949 = vpack.c.bf16 %v1740, %v1737
          %v1950 = vpack.c.bf16 %v1748, %v1745
          %v1951 = vpack.c.bf16 %v1756, %v1753
          %v1952 = vpack.c.bf16 %v1764, %v1761
          %v1953 = vpack.c.bf16 %v1772, %v1769
          %v1954 = vpack.c.bf16 %v1780, %v1777
          %v1955 = vpack.c.bf16 %v1788, %v1785
          %v1956 = vpack.c.bf16 %v1796, %v1793
          %v1957 = vpack.c.bf16 %v1804, %v1801
          %v1958 = vpack.c.bf16 %v1812, %v1809
          %v1959 = vpack.c.bf16 %v1820, %v1817
          %v1960 = vpack.c.bf16 %v1828, %v1825
          %v1961 = vpack.c.bf16 %v1836, %v1833
          %v1962 = vpack.c.bf16 %v1844, %v1841
          %v1963 = vpack.c.bf16 %v1852, %v1849
          %v1964 = vpack.c.bf16 %v1860, %v1857
          %v1965 = vpack.c.bf16 %v1868, %v1865
          %v1966 = vpack.c.bf16 %v1876, %v1873
          %v1967 = vpack.c.bf16 %v1884, %v1881
          %v1968 = vpack.c.bf16 %v1892, %v1889
          %v1969 = vpack.c.bf16 %v1900, %v1897
          %v1970 = vpack.c.bf16 %v1908, %v1905
          %v1971 = vpack.c.bf16 %v1916, %v1913
          %v1972 = vpack.c.bf16 %v1924, %v1921
          %v1973 = vpack.c.bf16 %v1932, %v1929
          %v1974 = vpack.c.bf16 %v1940, %v1937
          %s1975 = ssub.s32 1, %s170
          %s1976 = sshra.s32 %s171, 4
          %s1977 = sand.u32 %s171, 15
          %s1978 = smul.u32 %s1975, 32
          %s1979 = sadd.s32 %s1976, %s1978
          %s1980 = smul.addr %s1979, 8
          %s1981 = scalar_lea.vmem [#allocation2], %s1980
          %1982 = vst [vmem:[%s1981] sm:$0xff] %v1943
          %1983 = vst [vmem:[%s1981 + $0x8] sm:$0xff] %v1944
          %1984 = vst [vmem:[%s1981 + $0x10] sm:$0xff] %v1945
          %1985 = vst [vmem:[%s1981 + $0x18] sm:$0xff] %v1946
          %1986 = vst [vmem:[%s1981 + $0x20] sm:$0xff] %v1947
          %1987 = vst [vmem:[%s1981 + $0x28] sm:$0xff] %v1948
          %1988 = vst [vmem:[%s1981 + $0x30] sm:$0xff] %v1949
          %1989 = vst [vmem:[%s1981 + $0x38] sm:$0xff] %v1950
          %1990 = vst [vmem:[%s1981 + $0x40] sm:$0xff] %v1951
          %1991 = vst [vmem:[%s1981 + $0x48] sm:$0xff] %v1952
          %1992 = vst [vmem:[%s1981 + $0x50] sm:$0xff] %v1953
          %1993 = vst [vmem:[%s1981 + $0x58] sm:$0xff] %v1954
          %1994 = vst [vmem:[%s1981 + $0x60] sm:$0xff] %v1955
          %1995 = vst [vmem:[%s1981 + $0x68] sm:$0xff] %v1956
          %1996 = vst [vmem:[%s1981 + $0x70] sm:$0xff] %v1957
          %1997 = vst [vmem:[%s1981 + $0x78] sm:$0xff] %v1958
          %1998 = vst [vmem:[%s1981 + $0x80] sm:$0xff] %v1959
          %1999 = vst [vmem:[%s1981 + $0x88] sm:$0xff] %v1960
          %2000 = vst [vmem:[%s1981 + $0x90] sm:$0xff] %v1961
          %2001 = vst [vmem:[%s1981 + $0x98] sm:$0xff] %v1962
          %2002 = vst [vmem:[%s1981 + $0xa0] sm:$0xff] %v1963
          %2003 = vst [vmem:[%s1981 + $0xa8] sm:$0xff] %v1964
          %2004 = vst [vmem:[%s1981 + $0xb0] sm:$0xff] %v1965
          %2005 = vst [vmem:[%s1981 + $0xb8] sm:$0xff] %v1966
          %2006 = vst [vmem:[%s1981 + $0xc0] sm:$0xff] %v1967
          %2007 = vst [vmem:[%s1981 + $0xc8] sm:$0xff] %v1968
          %2008 = vst [vmem:[%s1981 + $0xd0] sm:$0xff] %v1969
          %2009 = vst [vmem:[%s1981 + $0xd8] sm:$0xff] %v1970
          %2010 = vst [vmem:[%s1981 + $0xe0] sm:$0xff] %v1971
          %2011 = vst [vmem:[%s1981 + $0xe8] sm:$0xff] %v1972
          %2012 = vst [vmem:[%s1981 + $0xf0] sm:$0xff] %v1973
          %2013 = vst [vmem:[%s1981 + $0xf8] sm:$0xff] %v1974
        $region53: #{tpu_custom_call.1} parent=27 // pred_fallthru
          _
        %p2014 = scmp.eq.s32.totalorder %s23, 2
        // Predicated region
        $region54: #{tpu_custom_call.1} parent=27 // pred_check
          %p2015 = pneg %p2014
        $region55: #{tpu_custom_call.1} parent=27 // pred_check_branch
          %2017 = sbr.rel (%p2015) target = $region57
        $region56: #{tpu_custom_call.1} parent=27 // pred_region
          %2018 = vst [vmem:[%s154] sm:$0xff] %v1232
          %2019 = vst [vmem:[%s154 + $0x8] sm:$0xff] %v1235
          %2020 = vst [vmem:[%s154 + $0x10] sm:$0xff] %v1240
          %2021 = vst [vmem:[%s154 + $0x18] sm:$0xff] %v1243
          %2022 = vst [vmem:[%s154 + $0x20] sm:$0xff] %v1248
          %2023 = vst [vmem:[%s154 + $0x28] sm:$0xff] %v1251
          %2024 = vst [vmem:[%s154 + $0x30] sm:$0xff] %v1256
          %2025 = vst [vmem:[%s154 + $0x38] sm:$0xff] %v1259
          %2026 = vst [vmem:[%s154 + $0x40] sm:$0xff] %v1264
          %2027 = vst [vmem:[%s154 + $0x48] sm:$0xff] %v1267
          %2028 = vst [vmem:[%s154 + $0x50] sm:$0xff] %v1272
          %2029 = vst [vmem:[%s154 + $0x58] sm:$0xff] %v1275
          %2030 = vst [vmem:[%s154 + $0x60] sm:$0xff] %v1280
          %2031 = vst [vmem:[%s154 + $0x68] sm:$0xff] %v1283
          %2032 = vst [vmem:[%s154 + $0x70] sm:$0xff] %v1288
          %2033 = vst [vmem:[%s154 + $0x78] sm:$0xff] %v1291
          %2034 = vst [vmem:[%s154 + $0x80] sm:$0xff] %v1296
          %2035 = vst [vmem:[%s154 + $0x88] sm:$0xff] %v1299
          %2036 = vst [vmem:[%s154 + $0x90] sm:$0xff] %v1304
          %2037 = vst [vmem:[%s154 + $0x98] sm:$0xff] %v1307
          %2038 = vst [vmem:[%s154 + $0xa0] sm:$0xff] %v1312
          %2039 = vst [vmem:[%s154 + $0xa8] sm:$0xff] %v1315
          %2040 = vst [vmem:[%s154 + $0xb0] sm:$0xff] %v1320
          %2041 = vst [vmem:[%s154 + $0xb8] sm:$0xff] %v1323
          %2042 = vst [vmem:[%s154 + $0xc0] sm:$0xff] %v1328
          %2043 = vst [vmem:[%s154 + $0xc8] sm:$0xff] %v1331
          %2044 = vst [vmem:[%s154 + $0xd0] sm:$0xff] %v1336
          %2045 = vst [vmem:[%s154 + $0xd8] sm:$0xff] %v1339
          %2046 = vst [vmem:[%s154 + $0xe0] sm:$0xff] %v1344
          %2047 = vst [vmem:[%s154 + $0xe8] sm:$0xff] %v1347
          %2048 = vst [vmem:[%s154 + $0xf0] sm:$0xff] %v1352
          %2049 = vst [vmem:[%s154 + $0xf8] sm:$0xff] %v1355
          %2050 = vst [vmem:[%s154 + $0x100] sm:$0xff] %v1360
          %2051 = vst [vmem:[%s154 + $0x108] sm:$0xff] %v1363
          %2052 = vst [vmem:[%s154 + $0x110] sm:$0xff] %v1368
          %2053 = vst [vmem:[%s154 + $0x118] sm:$0xff] %v1371
          %2054 = vst [vmem:[%s154 + $0x120] sm:$0xff] %v1376
          %2055 = vst [vmem:[%s154 + $0x128] sm:$0xff] %v1379
          %2056 = vst [vmem:[%s154 + $0x130] sm:$0xff] %v1384
          %2057 = vst [vmem:[%s154 + $0x138] sm:$0xff] %v1387
          %2058 = vst [vmem:[%s154 + $0x140] sm:$0xff] %v1392
          %2059 = vst [vmem:[%s154 + $0x148] sm:$0xff] %v1395
          %2060 = vst [vmem:[%s154 + $0x150] sm:$0xff] %v1400
          %2061 = vst [vmem:[%s154 + $0x158] sm:$0xff] %v1403
          %2062 = vst [vmem:[%s154 + $0x160] sm:$0xff] %v1408
          %2063 = vst [vmem:[%s154 + $0x168] sm:$0xff] %v1411
          %2064 = vst [vmem:[%s154 + $0x170] sm:$0xff] %v1416
          %2065 = vst [vmem:[%s154 + $0x178] sm:$0xff] %v1419
          %2066 = vst [vmem:[%s154 + $0x180] sm:$0xff] %v1424
          %2067 = vst [vmem:[%s154 + $0x188] sm:$0xff] %v1427
          %2068 = vst [vmem:[%s154 + $0x190] sm:$0xff] %v1432
          %2069 = vst [vmem:[%s154 + $0x198] sm:$0xff] %v1435
          %2070 = vst [vmem:[%s154 + $0x1a0] sm:$0xff] %v1440
          %2071 = vst [vmem:[%s154 + $0x1a8] sm:$0xff] %v1443
          %2072 = vst [vmem:[%s154 + $0x1b0] sm:$0xff] %v1448
          %2073 = vst [vmem:[%s154 + $0x1b8] sm:$0xff] %v1451
          %2074 = vst [vmem:[%s154 + $0x1c0] sm:$0xff] %v1456
          %2075 = vst [vmem:[%s154 + $0x1c8] sm:$0xff] %v1459
          %2076 = vst [vmem:[%s154 + $0x1d0] sm:$0xff] %v1464
          %2077 = vst [vmem:[%s154 + $0x1d8] sm:$0xff] %v1467
          %2078 = vst [vmem:[%s154 + $0x1e0] sm:$0xff] %v1472
          %2079 = vst [vmem:[%s154 + $0x1e8] sm:$0xff] %v1475
          %2080 = vst [vmem:[%s154 + $0x1f0] sm:$0xff] %v1480
          %2081 = vst [vmem:[%s154 + $0x1f8] sm:$0xff] %v1483
        $region57: #{tpu_custom_call.1} parent=27 // pred_fallthru
          _
        %s2082 = sand.u32 %s85, 1
        %s2083 = scalar_lea.sflag [#allocation7], %s2082
        %s2084 = sand.u32 %s85, 1
        %s2085 = smul.addr %s2084, 512
        %s2086 = scalar_lea.vmem [#allocation8], %s2085
        // Predicated region
        $region58: #{tpu_custom_call.1} parent=27 // pred_check
          %p2087 = pneg %p95
        $region59: #{tpu_custom_call.1} parent=27 // pred_check_branch
          %2089 = sbr.rel (%p2087) target = $region61
        $region60: #{tpu_custom_call.1} parent=27 // pred_region
          %p2090 = scmp.eq.s32.totalorder %s23, 2
          %s2091 = scalar_select %p2090, %s24, 0
          %s2092 = smul.u32 64, %s2091
          %s2094 = ssub.s32 8192, 8192
          %2095 = vsyncadd %s2083, %s2094
          %s2096 = smul.addr %s2092, 128
          %s2097 = scalar_lea.hbm %s4, %s2096
          %s2098 = sshll.u32 %s2086, 4
          %s2099 = int_to_ptr.vmem [resolvable:$true] %s2098
          %2104 = dma.vmem_to_hbm [thread:$0]  %s2099, 8192, %s2097, %s2083, 128, 128, 8
        $region61: #{tpu_custom_call.1} parent=27 // pred_fallthru
          _
      $region28: #{tpu_custom_call.1} parent=5 // pred_fallthru
        _
      %p2105 = scmp.le.s32.totalorder 2, %s14
      // Predicated region
      $region62: #{tpu_custom_call.1} parent=5 // pred_check
        %p2106 = pneg %p2105
      $region63: #{tpu_custom_call.1} parent=5 // pred_check_branch
        %2108 = sbr.rel (%p2106) target = $region65
      $region64: #{tpu_custom_call.1} parent=5 // pred_region
        %s2109 = ssub.s32 %s14, 2
        // Predicated region
        $region66: #{tpu_custom_call.1} parent=64 // pred_check
          %p2110 = pneg %p101
        $region67: #{tpu_custom_call.1} parent=64 // pred_check_branch
          %2112 = sbr.rel (%p2110) target = $region69
        $region68: #{tpu_custom_call.1} parent=64 // pred_region
          %s2113 = sand.u32 %s86, 1
          %s2114 = scalar_lea.sflag [#allocation7], %s2113
          %s2115 = sand.u32 %s86, 1
          %s2116 = smul.addr %s2115, 512
          %s2117 = scalar_lea.vmem [#allocation8], %s2116
          %2118 = dma.done %s2114, 8192
        $region69: #{tpu_custom_call.1} parent=64 // pred_fallthru
          _
      $region65: #{tpu_custom_call.1} parent=5 // pred_fallthru
        _
    $region6: #{tpu_custom_call.1} parent=1 // loop_footer
      %s18 = sadd.s32 1, %s14
    $region7: #{tpu_custom_call.1} parent=1 // loop_footer_branch
      %13 = sbr.rel target = $region3
    $region8: #{tpu_custom_call.1} parent=1 // loop_exit
      _
    %2119 = vsyncpa [#allocation6], 1
    %s2120 = scalar_lea.sflag [#allocation6], 1
    %2121 = vsyncpa %s2120, 1
    %2122 = vsyncpa [#allocation7], 1
    %s2123 = scalar_lea.sflag [#allocation7], 1
    %2124 = vsyncpa %s2123, 1
  %2125 = vsyncmov [#allocation4]
  %s2126 = vpop.sfrf %2125
  %p2127 = scmp.eq.s32.totalorder %s2126, 0
  %p2128 = pneg %p2127
  %2130 = shalt.err (%p2128)

</llo_original>
